<compile_context>
chip_gen: v7x
topology: tpu7x:2x2x1
jax: 0.10.0
libtpu: 0.0.40
codegen_flags: <defaults>
</compile_context>

<pallas_src>
import functools

import jax
import jax.numpy as jnp
from jax.experimental import pallas as pl
from jax.experimental.pallas import tpu as pltpu


# ---------------------------------------------------------------------------
# Fused kernel: conv_pw (1x1 + BN + ReLU) -> conv_dw (3x3 dw + BN + ReLU)
#               -> conv_pwl (1x1 + BN) [+ residual]
# BN scales are pre-folded into the weights; only biases are applied here.
# ---------------------------------------------------------------------------
def _fused_ir_kernel(x_ref, wpw_ref, b1_ref, kdw_ref, b2_ref, wpwlT_ref,
                     b3_ref, o_ref, *scratch, stride, H, W, Ho, Wo, rb,
                     has_residual):
    f32 = jnp.float32
    hpad_ref = scratch[0]
    dint_ref = scratch[1] if stride == 2 else None
    hid = hpad_ref.shape[-1]                       # lane-padded hidden width

    # ---- zero only the 1-pixel halo border (every step: safe under megacore
    #      grid sharding; the interior is fully overwritten below) ------------
    zrow = jnp.zeros((1, W + 2, hid), f32)
    hpad_ref[pl.ds(0, 1), :, :] = zrow
    hpad_ref[pl.ds(H + 1, 1), :, :] = zrow
    zcol = jnp.zeros((H, 1, hid), f32)
    hpad_ref[pl.ds(1, H), pl.ds(0, 1), :] = zcol
    hpad_ref[pl.ds(1, H), pl.ds(W + 1, 1), :] = zcol

    # ---- conv_pw: 1x1 conv (MXU, bf16 operands, f32 accum) + bias + ReLU ----
    x = x_ref[...]                                 # (Cin, H*W), native NCHW slab
    # h[p, c] = sum_i x[i, p] * w_pw_folded[i, c]  (contract dim 0 of both;
    # verified orientation: no transpose of the large operand is introduced)
    h = jax.lax.dot_general(
        x.astype(wpw_ref.dtype), wpw_ref[...],
        (((0,), (0,)), ((), ())),
        preferred_element_type=f32)                # (H*W, hid)
    h = jnp.maximum(h + b1_ref[...], 0.0)

    # ---- stage hidden activation into the halo scratch (interior only) -----
    hpad_ref[pl.ds(1, H), pl.ds(1, W), :] = h.reshape(H, W, hid)

    if stride == 2:
        # De-interleave W once: even padded cols -> dint[:, 0:Wo+1),
        # odd padded cols -> dint[:, Wo+1:2*Wo+1).  All rows are copied from
        # hpad, so dint inherits the zero halo and needs no zeroing of its own.
        dint_ref[:, pl.ds(0, Wo + 1), :] = hpad_ref[:, pl.ds(0, Wo + 1, stride=2), :]
        dint_ref[:, pl.ds(Wo + 1, Wo), :] = hpad_ref[:, pl.ds(1, Wo, stride=2), :]

    # ---- conv_dw (3x3 dw, f32) + bias + ReLU, then conv_pwl (1x1, MXU) + bias
    #      [+ residual], processed per row-block so acc stays vreg-resident ---
    for r0 in range(0, Ho, rb):
        rcur = min(rb, Ho - r0)
        acc = jnp.zeros((rcur, Wo, hid), f32)
        for kh in range(3):
            for kw in range(3):
                tap = kdw_ref[kh * 3 + kw, :]      # (hid,) folded per-channel tap
                if stride == 1:
                    patch = hpad_ref[pl.ds(r0 + kh, rcur), pl.ds(kw, Wo), :]
                else:
                    # kw=0 -> even plane @0, kw=1 -> odd plane @Wo+1,
                    # kw=2 -> even plane @1.  H stride-2 is on the cheap outer axis.
                    cstart = (Wo + 1) if kw == 1 else (kw // 2)
                    patch = dint_ref[pl.ds(2 * r0 + kh, rcur, stride=2),
                                     pl.ds(cstart, Wo), :]
                acc = acc + patch * tap
        dwy = jnp.maximum(acc + b2_ref[...], 0.0)                  # (rcur, Wo, hid)

        hm = dwy.reshape(rcur * Wo, hid).astype(wpwlT_ref.dtype)   # bf16 MXU rhs
        # y[c, p] = sum_k w_pwl_T_folded[c, k] * hm[p, k]
        y = jax.lax.dot_general(
            wpwlT_ref[...], hm, (((1,), (1,)), ((), ())),
            preferred_element_type=f32)                            # (oup, rcur*Wo)
        y = y + b3_ref[...]
        if has_residual:
            y = y + x[:, r0 * Wo:(r0 + rcur) * Wo].astype(f32)
        o_ref[:, pl.ds(r0 * Wo, rcur * Wo)] = y.astype(o_ref.dtype)


# ---------------------------------------------------------------------------
# Wrapper
# ---------------------------------------------------------------------------
def _vmem_ceiling_bytes():
    try:
        info = pltpu.get_tpu_info()
        cap = int(getattr(info, "vmem_capacity_bytes", 64 * 1024 * 1024))
    except Exception:                               # unknown chip -> be safe
        cap = 64 * 1024 * 1024
    if cap >= 100 * 1024 * 1024:                    # v5e / v6e: 128 MiB physical
        return 100 * 1024 * 1024
    return max(cap - 12 * 1024 * 1024, 24 * 1024 * 1024)   # v7x: 64 MiB physical


def inverted_residual(x_nchw, params, *, stride):
    """InvertedResidual forward. x_nchw: (N, Cin, H, W), NCHW like PyTorch."""
    N, Cin, H, W = x_nchw.shape
    hidden = params["w_pw"].shape[1]
    oup = params["w_pwl"].shape[1]
    has_residual = (Cin == oup) and (stride == 1)
    Ho = (H - 1) // stride + 1
    Wo = (W - 1) // stride + 1
    hid_pad = pl.cdiv(hidden, 128) * 128            # lane-pad expanded channels

    def padh(a, axis=1):                            # zero-pad hidden axis
        pad = [(0, 0)] * a.ndim
        pad[axis] = (0, hid_pad - hidden)
        return jnp.pad(a, pad)

    # Fold BN scales into the weights in f32, then cast MXU operands to bf16.
    w_pw = padh(params["w_pw"] * params["s1"][None, :]).astype(jnp.bfloat16)
    b1 = padh(params["b1"].reshape(1, hidden)).astype(jnp.float32)
    k_dw = padh(params["w_dw"] * params["s2"][None, :]).astype(jnp.float32)
    b2 = padh(params["b2"].reshape(1, hidden)).astype(jnp.float32)
    w_pwl_t = padh(params["w_pwl"].T * params["s3"][:, None]).astype(jnp.bfloat16)
    b3 = params["b3"].reshape(oup, 1).astype(jnp.float32)

    x_flat = x_nchw.reshape(N, Cin, H * W)          # free reshape, NCHW-major

    # Row-block size: keep the depthwise accumulator ~<= 16 vregs.
    vregs_per_row = pl.cdiv(Wo, 8) * pl.cdiv(hid_pad, 128)
    rb = max(1, min(Ho, 16 // vregs_per_row))

    kernel = functools.partial(_fused_ir_kernel, stride=stride, H=H, W=W,
                               Ho=Ho, Wo=Wo, rb=rb, has_residual=has_residual)

    def const_spec(a):                              # grid-invariant block
        nd = a.ndim
        return pl.BlockSpec(a.shape, lambda n, _nd=nd: (0,) * _nd)

    scratch_shapes = [pltpu.VMEM((H + 2, W + 2, hid_pad), jnp.float32)]
    if stride == 2:
        scratch_shapes.append(pltpu.VMEM((H + 2, 2 * Wo + 1, hid_pad), jnp.float32))

    # VMEM budget: double-buffered I/O blocks + params + scratches + temporaries.
    bpe_in = jnp.dtype(x_nchw.dtype).itemsize
    io_blk = 2 * bpe_in * (Cin * H * W + oup * Ho * Wo)
    par = 2 * (2 * (w_pw.size + w_pwl_t.size)
               + 4 * (b1.size + k_dw.size + b2.size + b3.size))
    scr = 4 * (H + 2) * (W + 2) * hid_pad
    if stride == 2:
        scr += 4 * (H + 2) * (2 * Wo + 1) * hid_pad
    tmp = 3 * 4 * H * W * hid_pad + 4 * Cin * H * W   # h (+bf16 copy, slack), x f32
    need = io_blk + par + scr + tmp + (4 << 20)
    vmem_limit = int(min(_vmem_ceiling_bytes(), max(need, 32 << 20)))

    flops = (2 * N * H * W * Cin * hidden
             + 2 * N * Ho * Wo * 9 * hidden
             + 2 * N * Ho * Wo * hidden * oup)
    bytes_accessed = (N * Cin * H * W * bpe_in + N * oup * Ho * Wo * bpe_in
                      + 2 * (w_pw.size + w_pwl_t.size)
                      + 4 * (b1.size + k_dw.size + b2.size + b3.size))

    out = pl.pallas_call(
        kernel,
        out_shape=jax.ShapeDtypeStruct((N, oup, Ho * Wo), x_nchw.dtype),
        grid=(N,),
        in_specs=[
            pl.BlockSpec((None, Cin, H * W), lambda n: (n, 0, 0)),
            const_spec(w_pw), const_spec(b1),
            const_spec(k_dw), const_spec(b2),
            const_spec(w_pwl_t), const_spec(b3),
        ],
        out_specs=pl.BlockSpec((None, oup, Ho * Wo), lambda n: (n, 0, 0)),
        scratch_shapes=scratch_shapes,
        compiler_params=pltpu.CompilerParams(
            dimension_semantics=("parallel",),
            vmem_limit_bytes=vmem_limit),
        cost_estimate=pl.CostEstimate(flops=flops, transcendentals=0,
                                      bytes_accessed=bytes_accessed),
    )(x_flat, w_pw, b1, k_dw, b2, w_pwl_t, b3)

    return out.reshape(N, oup, Ho, Wo)              # free reshape (already NCHW)


# ---------------------------------------------------------------------------
# Deterministic parameter init (synthetic; mirrors the module's shapes)
# ---------------------------------------------------------------------------
def _fold_bn(gamma, beta, mean, var, eps=1e-5):
    scale = gamma / jnp.sqrt(var + eps)
    return scale, beta - mean * scale


def init_params(key, inp, oup, expand_ratio):
    hidden = int(round(inp * expand_ratio))
    ks = jax.random.split(key, 6)

    def bn(k, c):
        k1, k2, k3, k4 = jax.random.split(k, 4)
        gamma = jax.random.uniform(k1, (c,), jnp.float32, 0.5, 1.5)
        beta = 0.1 * jax.random.normal(k2, (c,), jnp.float32)
        mean = 0.1 * jax.random.normal(k3, (c,), jnp.float32)
        var = jax.random.uniform(k4, (c,), jnp.float32, 0.5, 1.5)
        return _fold_bn(gamma, beta, mean, var)

    w_pw = 0.1 * jax.random.normal(ks[0], (inp, hidden), jnp.float32)      # 1x1
    s1, b1 = bn(ks[1], hidden)
    w_dw = 0.1 * jax.random.normal(ks[2], (9, hidden), jnp.float32)        # 3x3 dw
    s2, b2 = bn(ks[3], hidden)
    w_pwl = 0.1 * jax.random.normal(ks[4], (hidden, oup), jnp.float32)     # 1x1
    s3, b3 = bn(ks[5], oup)
    return dict(w_pw=w_pw, s1=s1, b1=b1, w_dw=w_dw, s2=s2, b2=b2,
                w_pwl=w_pwl, s3=s3, b3=b3)


# ---------------------------------------------------------------------------
# Pure-JAX reference (same numerics: f32 BN-fold, bf16 MXU operands, f32 accum)
# ---------------------------------------------------------------------------
def ref_forward(x_nchw, params, stride):
    f32 = jnp.float32
    x = jnp.transpose(x_nchw, (0, 2, 3, 1)).astype(f32)           # NHWC
    Cin = x.shape[-1]
    oup = params["w_pwl"].shape[1]

    def mm(a, b):  # bf16 operands, f32 accumulation (matches the kernel)
        return jnp.dot(a.astype(jnp.bfloat16), b.astype(jnp.bfloat16),
                       preferred_element_type=f32)

    w_pw = params["w_pw"] * params["s1"][None, :]
    h = jnp.maximum(mm(x, w_pw) + params["b1"], 0.0)
    k = (params["w_dw"] * params["s2"][None, :]).reshape(3, 3, -1)[:, :, None, :]
    h = jax.lax.conv_general_dilated(
        h, k, (stride, stride), ((1, 1), (1, 1)),
        dimension_numbers=("NHWC", "HWIO", "NHWC"),
        feature_group_count=h.shape[-1])
    h = jnp.maximum(h + params["b2"], 0.0)
    w_pwl = params["w_pwl"] * params["s3"][None, :]
    y = mm(h, w_pwl) + params["b3"]
    if Cin == oup and stride == 1:
        y = y + x
    return jnp.transpose(y, (0, 3, 1, 2))


if __name__ == "__main__":
    root = jax.random.PRNGKey(0)
    k1, k2, k3, k4 = jax.random.split(root, 4)

    # Case 1: stride=1 with residual (inp == oup), expand_ratio=2 -> hidden=8.
    inp, oup, stride, expand = 4, 4, 1, 2
    params = init_params(k1, inp, oup, expand)
    x = jax.random.normal(k2, (2, inp, 16, 16), jnp.float32)      # NCHW like PyTorch
    out = jax.block_until_ready(inverted_residual(x, params, stride=stride))
    ref = ref_forward(x, params, stride)
    assert out.shape == (2, oup, 16, 16), out.shape
    err = float(jnp.max(jnp.abs(out - ref)))
    assert jnp.allclose(out, ref, atol=1e-3, rtol=1e-3), err

    # Case 2: stride=2 downsampling block (no residual), expand_ratio=6.
    inp2, oup2, stride2, expand2 = 4, 8, 2, 6
    params2 = init_params(k3, inp2, oup2, expand2)
    x2 = jax.random.normal(k4, (2, inp2, 16, 16), jnp.float32)
    out2 = jax.block_until_ready(inverted_residual(x2, params2, stride=stride2))
    ref2 = ref_forward(x2, params2, stride2)
    assert out2.shape == (2, oup2, 8, 8), out2.shape
    err2 = float(jnp.max(jnp.abs(out2 - ref2)))
    assert jnp.allclose(out2, ref2, atol=1e-3, rtol=1e-3), err2

    print("KERNEL_OK")
</pallas_src>

<mosaic_0001>
module attributes {stable_mosaic.version = 11 : i64} {
  func.func @_fused_ir_kernel(%arg0: i32, %arg1: memref<1x4x256xf32, #tpu.memory_space<vmem>>, %arg2: memref<4x128xbf16, #tpu.memory_space<vmem>>, %arg3: memref<1x128xf32, #tpu.memory_space<vmem>>, %arg4: memref<9x128xf32, #tpu.memory_space<vmem>>, %arg5: memref<1x128xf32, #tpu.memory_space<vmem>>, %arg6: memref<4x128xbf16, #tpu.memory_space<vmem>>, %arg7: memref<4x1xf32, #tpu.memory_space<vmem>>, %arg8: memref<1x4x256xf32, #tpu.memory_space<vmem>>, %arg9: memref<18x18x128xf32, #tpu.memory_space<vmem>>) attributes {dimension_semantics = [#tpu.dimension_semantics<parallel>], iteration_bounds = array<i64: 2>, scalar_prefetch = 0 : i64, scratch_operands = 1 : i64, tpu.core_type = #tpu.core_type<tc>, window_params = [{transform_indices = @transform_0, window_bounds = array<i64: 1, 4, 256>}, {pipeline_mode = #tpu.pipeline_mode<synchronous>, transform_indices = @transform_1, window_bounds = array<i64: 4, 128>}, {pipeline_mode = #tpu.pipeline_mode<synchronous>, transform_indices = @transform_2, window_bounds = array<i64: 1, 128>}, {pipeline_mode = #tpu.pipeline_mode<synchronous>, transform_indices = @transform_3, window_bounds = array<i64: 9, 128>}, {pipeline_mode = #tpu.pipeline_mode<synchronous>, transform_indices = @transform_4, window_bounds = array<i64: 1, 128>}, {pipeline_mode = #tpu.pipeline_mode<synchronous>, transform_indices = @transform_5, window_bounds = array<i64: 4, 128>}, {pipeline_mode = #tpu.pipeline_mode<synchronous>, transform_indices = @transform_6, window_bounds = array<i64: 4, 1>}, {transform_indices = @transform_7, window_bounds = array<i64: 1, 4, 256>}]} {
    %cst = arith.constant 0.000000e+00 : f32
    %0 = vector.broadcast %cst : f32 to vector<1x18x128xf32>
    %c0 = arith.constant 0 : index
    %c0_0 = arith.constant 0 : index
    %c0_1 = arith.constant 0 : index
    %1 = vector.load %arg9[%c0, %c0_0, %c0_1] : memref<18x18x128xf32, #tpu.memory_space<vmem>>, vector<1x18x128xf32>
    tpu.vector_store %arg9[%c0, %c0_0, %c0_1], %0 {strides = array<i32>} : memref<18x18x128xf32, #tpu.memory_space<vmem>>, vector<1x18x128xf32>,
    %c17 = arith.constant 17 : index
    %c0_2 = arith.constant 0 : index
    %c0_3 = arith.constant 0 : index
    %2 = vector.load %arg9[%c17, %c0_2, %c0_3] : memref<18x18x128xf32, #tpu.memory_space<vmem>>, vector<1x18x128xf32>
    tpu.vector_store %arg9[%c17, %c0_2, %c0_3], %0 {strides = array<i32>} : memref<18x18x128xf32, #tpu.memory_space<vmem>>, vector<1x18x128xf32>,
    %cst_4 = arith.constant 0.000000e+00 : f32
    %3 = vector.broadcast %cst_4 : f32 to vector<16x1x128xf32>
    %c1 = arith.constant 1 : index
    %c0_5 = arith.constant 0 : index
    %c0_6 = arith.constant 0 : index
    %4 = vector.load %arg9[%c1, %c0_5, %c0_6] : memref<18x18x128xf32, #tpu.memory_space<vmem>>, vector<16x1x128xf32>
    tpu.vector_store %arg9[%c1, %c0_5, %c0_6], %3 {strides = array<i32>} : memref<18x18x128xf32, #tpu.memory_space<vmem>>, vector<16x1x128xf32>,
    %c1_7 = arith.constant 1 : index
    %c17_8 = arith.constant 17 : index
    %c0_9 = arith.constant 0 : index
    %5 = vector.load %arg9[%c1_7, %c17_8, %c0_9] : memref<18x18x128xf32, #tpu.memory_space<vmem>>, vector<16x1x128xf32>
    tpu.vector_store %arg9[%c1_7, %c17_8, %c0_9], %3 {strides = array<i32>} : memref<18x18x128xf32, #tpu.memory_space<vmem>>, vector<16x1x128xf32>,
    %c0_10 = arith.constant 0 : index
    %c0_11 = arith.constant 0 : index
    %c0_12 = arith.constant 0 : index
    %6 = vector.load %arg1[%c0_10, %c0_11, %c0_12] : memref<1x4x256xf32, #tpu.memory_space<vmem>>, vector<1x4x256xf32>
    %7 = vector.shape_cast %6 : vector<1x4x256xf32> to vector<4x256xf32>
    %8 = arith.truncf %7 : vector<4x256xf32> to vector<4x256xbf16>
    %c0_13 = arith.constant 0 : index
    %c0_14 = arith.constant 0 : index
    %9 = vector.load %arg2[%c0_13, %c0_14] : memref<4x128xbf16, #tpu.memory_space<vmem>>, vector<4x128xbf16>
    %cst_15 = arith.constant dense<0.000000e+00> : vector<256x128xf32>
    %10 = tpu.matmul %8, %9, %cst_15 {dimension_numbers = #tpu.dot_dimension_numbers<[0], [0], [1], [1], [0, 1, 1, 1], [], []>} : vector<4x256xbf16>, vector<4x128xbf16>, vector<256x128xf32> -> vector<256x128xf32>
    %c0_16 = arith.constant 0 : index
    %c0_17 = arith.constant 0 : index
    %11 = vector.load %arg3[%c0_16, %c0_17] : memref<1x128xf32, #tpu.memory_space<vmem>>, vector<1x128xf32>
    %12 = vector.broadcast %11 : vector<1x128xf32> to vector<256x128xf32>
    %13 = arith.addf %10, %12 : vector<256x128xf32>
    %cst_18 = arith.constant 0.000000e+00 : f32
    %14 = vector.broadcast %cst_18 : f32 to vector<256x128xf32>
    %15 = arith.maximumf %13, %14 : vector<256x128xf32>
    %16 = vector.shape_cast %15 : vector<256x128xf32> to vector<16x16x128xf32>
    %c1_19 = arith.constant 1 : index
    %c1_20 = arith.constant 1 : index
    %c0_21 = arith.constant 0 : index
    %17 = vector.load %arg9[%c1_19, %c1_20, %c0_21] : memref<18x18x128xf32, #tpu.memory_space<vmem>>, vector<16x16x128xf32>
    tpu.vector_store %arg9[%c1_19, %c1_20, %c0_21], %16 {strides = array<i32>} : memref<18x18x128xf32, #tpu.memory_space<vmem>>, vector<16x16x128xf32>,
    %cst_22 = arith.constant 0.000000e+00 : f32
    %18 = vector.broadcast %cst_22 : f32 to vector<8x16x128xf32>
    %c0_23 = arith.constant 0 : index
    %c0_24 = arith.constant 0 : index
    %19 = vector.load %arg4[%c0_23, %c0_24] : memref<9x128xf32, #tpu.memory_space<vmem>>, vector<1x128xf32>
    %20 = vector.shape_cast %19 : vector<1x128xf32> to vector<128xf32>
    %c0_25 = arith.constant 0 : index
    %c0_26 = arith.constant 0 : index
    %c0_27 = arith.constant 0 : index
    %21 = vector.load %arg9[%c0_25, %c0_26, %c0_27] : memref<18x18x128xf32, #tpu.memory_space<vmem>>, vector<8x16x128xf32>
    %22 = vector.shape_cast %20 : vector<128xf32> to vector<1x1x128xf32>
    %23 = vector.broadcast %22 : vector<1x1x128xf32> to vector<8x16x128xf32>
    %24 = arith.mulf %21, %23 : vector<8x16x128xf32>
    %25 = arith.addf %18, %24 : vector<8x16x128xf32>
    %c1_28 = arith.constant 1 : index
    %c0_29 = arith.constant 0 : index
    %26 = vector.load %arg4[%c1_28, %c0_29] : memref<9x128xf32, #tpu.memory_space<vmem>>, vector<1x128xf32>
    %27 = vector.shape_cast %26 : vector<1x128xf32> to vector<128xf32>
    %c0_30 = arith.constant 0 : index
    %c1_31 = arith.constant 1 : index
    %c0_32 = arith.constant 0 : index
    %28 = vector.load %arg9[%c0_30, %c1_31, %c0_32] : memref<18x18x128xf32, #tpu.memory_space<vmem>>, vector<8x16x128xf32>
    %29 = vector.shape_cast %27 : vector<128xf32> to vector<1x1x128xf32>
    %30 = vector.broadcast %29 : vector<1x1x128xf32> to vector<8x16x128xf32>
    %31 = arith.mulf %28, %30 : vector<8x16x128xf32>
    %32 = arith.addf %25, %31 : vector<8x16x128xf32>
    %c2 = arith.constant 2 : index
    %c0_33 = arith.constant 0 : index
    %33 = vector.load %arg4[%c2, %c0_33] : memref<9x128xf32, #tpu.memory_space<vmem>>, vector<1x128xf32>
    %34 = vector.shape_cast %33 : vector<1x128xf32> to vector<128xf32>
    %c0_34 = arith.constant 0 : index
    %c2_35 = arith.constant 2 : index
    %c0_36 = arith.constant 0 : index
    %35 = vector.load %arg9[%c0_34, %c2_35, %c0_36] : memref<18x18x128xf32, #tpu.memory_space<vmem>>, vector<8x16x128xf32>
    %36 = vector.shape_cast %34 : vector<128xf32> to vector<1x1x128xf32>
    %37 = vector.broadcast %36 : vector<1x1x128xf32> to vector<8x16x128xf32>
    %38 = arith.mulf %35, %37 : vector<8x16x128xf32>
    %39 = arith.addf %32, %38 : vector<8x16x128xf32>
    %c3 = arith.constant 3 : index
    %c0_37 = arith.constant 0 : index
    %40 = vector.load %arg4[%c3, %c0_37] : memref<9x128xf32, #tpu.memory_space<vmem>>, vector<1x128xf32>
    %41 = vector.shape_cast %40 : vector<1x128xf32> to vector<128xf32>
    %c1_38 = arith.constant 1 : index
    %c0_39 = arith.constant 0 : index
    %c0_40 = arith.constant 0 : index
    %42 = vector.load %arg9[%c1_38, %c0_39, %c0_40] : memref<18x18x128xf32, #tpu.memory_space<vmem>>, vector<8x16x128xf32>
    %43 = vector.shape_cast %41 : vector<128xf32> to vector<1x1x128xf32>
    %44 = vector.broadcast %43 : vector<1x1x128xf32> to vector<8x16x128xf32>
    %45 = arith.mulf %42, %44 : vector<8x16x128xf32>
    %46 = arith.addf %39, %45 : vector<8x16x128xf32>
    %c4 = arith.constant 4 : index
    %c0_41 = arith.constant 0 : index
    %47 = vector.load %arg4[%c4, %c0_41] : memref<9x128xf32, #tpu.memory_space<vmem>>, vector<1x128xf32>
    %48 = vector.shape_cast %47 : vector<1x128xf32> to vector<128xf32>
    %c1_42 = arith.constant 1 : index
    %c1_43 = arith.constant 1 : index
    %c0_44 = arith.constant 0 : index
    %49 = vector.load %arg9[%c1_42, %c1_43, %c0_44] : memref<18x18x128xf32, #tpu.memory_space<vmem>>, vector<8x16x128xf32>
    %50 = vector.shape_cast %48 : vector<128xf32> to vector<1x1x128xf32>
    %51 = vector.broadcast %50 : vector<1x1x128xf32> to vector<8x16x128xf32>
    %52 = arith.mulf %49, %51 : vector<8x16x128xf32>
    %53 = arith.addf %46, %52 : vector<8x16x128xf32>
    %c5 = arith.constant 5 : index
    %c0_45 = arith.constant 0 : index
    %54 = vector.load %arg4[%c5, %c0_45] : memref<9x128xf32, #tpu.memory_space<vmem>>, vector<1x128xf32>
    %55 = vector.shape_cast %54 : vector<1x128xf32> to vector<128xf32>
    %c1_46 = arith.constant 1 : index
    %c2_47 = arith.constant 2 : index
    %c0_48 = arith.constant 0 : index
    %56 = vector.load %arg9[%c1_46, %c2_47, %c0_48] : memref<18x18x128xf32, #tpu.memory_space<vmem>>, vector<8x16x128xf32>
    %57 = vector.shape_cast %55 : vector<128xf32> to vector<1x1x128xf32>
    %58 = vector.broadcast %57 : vector<1x1x128xf32> to vector<8x16x128xf32>
    %59 = arith.mulf %56, %58 : vector<8x16x128xf32>
    %60 = arith.addf %53, %59 : vector<8x16x128xf32>
    %c6 = arith.constant 6 : index
    %c0_49 = arith.constant 0 : index
    %61 = vector.load %arg4[%c6, %c0_49] : memref<9x128xf32, #tpu.memory_space<vmem>>, vector<1x128xf32>
    %62 = vector.shape_cast %61 : vector<1x128xf32> to vector<128xf32>
    %c2_50 = arith.constant 2 : index
    %c0_51 = arith.constant 0 : index
    %c0_52 = arith.constant 0 : index
    %63 = vector.load %arg9[%c2_50, %c0_51, %c0_52] : memref<18x18x128xf32, #tpu.memory_space<vmem>>, vector<8x16x128xf32>
    %64 = vector.shape_cast %62 : vector<128xf32> to vector<1x1x128xf32>
    %65 = vector.broadcast %64 : vector<1x1x128xf32> to vector<8x16x128xf32>
    %66 = arith.mulf %63, %65 : vector<8x16x128xf32>
    %67 = arith.addf %60, %66 : vector<8x16x128xf32>
    %c7 = arith.constant 7 : index
    %c0_53 = arith.constant 0 : index
    %68 = vector.load %arg4[%c7, %c0_53] : memref<9x128xf32, #tpu.memory_space<vmem>>, vector<1x128xf32>
    %69 = vector.shape_cast %68 : vector<1x128xf32> to vector<128xf32>
    %c2_54 = arith.constant 2 : index
    %c1_55 = arith.constant 1 : index
    %c0_56 = arith.constant 0 : index
    %70 = vector.load %arg9[%c2_54, %c1_55, %c0_56] : memref<18x18x128xf32, #tpu.memory_space<vmem>>, vector<8x16x128xf32>
    %71 = vector.shape_cast %69 : vector<128xf32> to vector<1x1x128xf32>
    %72 = vector.broadcast %71 : vector<1x1x128xf32> to vector<8x16x128xf32>
    %73 = arith.mulf %70, %72 : vector<8x16x128xf32>
    %74 = arith.addf %67, %73 : vector<8x16x128xf32>
    %c8 = arith.constant 8 : index
    %c0_57 = arith.constant 0 : index
    %75 = vector.load %arg4[%c8, %c0_57] : memref<9x128xf32, #tpu.memory_space<vmem>>, vector<1x128xf32>
    %76 = vector.shape_cast %75 : vector<1x128xf32> to vector<128xf32>
    %c2_58 = arith.constant 2 : index
    %c2_59 = arith.constant 2 : index
    %c0_60 = arith.constant 0 : index
    %77 = vector.load %arg9[%c2_58, %c2_59, %c0_60] : memref<18x18x128xf32, #tpu.memory_space<vmem>>, vector<8x16x128xf32>
    %78 = vector.shape_cast %76 : vector<128xf32> to vector<1x1x128xf32>
    %79 = vector.broadcast %78 : vector<1x1x128xf32> to vector<8x16x128xf32>
    %80 = arith.mulf %77, %79 : vector<8x16x128xf32>
    %81 = arith.addf %74, %80 : vector<8x16x128xf32>
    %c0_61 = arith.constant 0 : index
    %c0_62 = arith.constant 0 : index
    %82 = vector.load %arg5[%c0_61, %c0_62] : memref<1x128xf32, #tpu.memory_space<vmem>>, vector<1x128xf32>
    %83 = vector.shape_cast %82 : vector<1x128xf32> to vector<1x1x128xf32>
    %84 = vector.broadcast %83 : vector<1x1x128xf32> to vector<8x16x128xf32>
    %85 = arith.addf %81, %84 : vector<8x16x128xf32>
    %cst_63 = arith.constant 0.000000e+00 : f32
    %86 = vector.broadcast %cst_63 : f32 to vector<8x16x128xf32>
    %87 = arith.maximumf %85, %86 : vector<8x16x128xf32>
    %88 = vector.shape_cast %87 : vector<8x16x128xf32> to vector<128x128xf32>
    %89 = arith.truncf %88 : vector<128x128xf32> to vector<128x128xbf16>
    %c0_64 = arith.constant 0 : index
    %c0_65 = arith.constant 0 : index
    %90 = vector.load %arg6[%c0_64, %c0_65] : memref<4x128xbf16, #tpu.memory_space<vmem>>, vector<4x128xbf16>
    %cst_66 = arith.constant dense<0.000000e+00> : vector<4x128xf32>
    %91 = tpu.matmul %90, %89, %cst_66 {dimension_numbers = #tpu.dot_dimension_numbers<[1], [1], [0], [0], [0, 0, 1, 0], [], []>} : vector<4x128xbf16>, vector<128x128xbf16>, vector<4x128xf32> -> vector<4x128xf32>
    %c0_67 = arith.constant 0 : index
    %c0_68 = arith.constant 0 : index
    %92 = vector.load %arg7[%c0_67, %c0_68] : memref<4x1xf32, #tpu.memory_space<vmem>>, vector<4x1xf32>
    %93 = vector.broadcast %92 : vector<4x1xf32> to vector<4x128xf32>
    %94 = arith.addf %91, %93 : vector<4x128xf32>
    %95 = vector.extract_strided_slice %7 {offsets = [0, 0], sizes = [4, 128], strides = [1, 1]} : vector<4x256xf32> to vector<4x128xf32>
    %96 = arith.addf %94, %95 : vector<4x128xf32>
    %c0_69 = arith.constant 0 : index
    %c0_70 = arith.constant 0 : index
    %c0_71 = arith.constant 0 : index
    %97 = vector.load %arg8[%c0_69, %c0_70, %c0_71] : memref<1x4x256xf32, #tpu.memory_space<vmem>>, vector<1x4x128xf32>
    %98 = vector.shape_cast %97 : vector<1x4x128xf32> to vector<4x128xf32>
    %99 = vector.shape_cast %96 : vector<4x128xf32> to vector<1x4x128xf32>
    tpu.vector_store %arg8[%c0_69, %c0_70, %c0_71], %99 {strides = array<i32>} : memref<1x4x256xf32, #tpu.memory_space<vmem>>, vector<1x4x128xf32>,
    %cst_72 = arith.constant 0.000000e+00 : f32
    %100 = vector.broadcast %cst_72 : f32 to vector<8x16x128xf32>
    %c0_73 = arith.constant 0 : index
    %c0_74 = arith.constant 0 : index
    %101 = vector.load %arg4[%c0_73, %c0_74] : memref<9x128xf32, #tpu.memory_space<vmem>>, vector<1x128xf32>
    %102 = vector.shape_cast %101 : vector<1x128xf32> to vector<128xf32>
    %c8_75 = arith.constant 8 : index
    %c0_76 = arith.constant 0 : index
    %c0_77 = arith.constant 0 : index
    %103 = vector.load %arg9[%c8_75, %c0_76, %c0_77] : memref<18x18x128xf32, #tpu.memory_space<vmem>>, vector<8x16x128xf32>
    %104 = vector.shape_cast %102 : vector<128xf32> to vector<1x1x128xf32>
    %105 = vector.broadcast %104 : vector<1x1x128xf32> to vector<8x16x128xf32>
    %106 = arith.mulf %103, %105 : vector<8x16x128xf32>
    %107 = arith.addf %100, %106 : vector<8x16x128xf32>
    %c1_78 = arith.constant 1 : index
    %c0_79 = arith.constant 0 : index
    %108 = vector.load %arg4[%c1_78, %c0_79] : memref<9x128xf32, #tpu.memory_space<vmem>>, vector<1x128xf32>
    %109 = vector.shape_cast %108 : vector<1x128xf32> to vector<128xf32>
    %c8_80 = arith.constant 8 : index
    %c1_81 = arith.constant 1 : index
    %c0_82 = arith.constant 0 : index
    %110 = vector.load %arg9[%c8_80, %c1_81, %c0_82] : memref<18x18x128xf32, #tpu.memory_space<vmem>>, vector<8x16x128xf32>
    %111 = vector.shape_cast %109 : vector<128xf32> to vector<1x1x128xf32>
    %112 = vector.broadcast %111 : vector<1x1x128xf32> to vector<8x16x128xf32>
    %113 = arith.mulf %110, %112 : vector<8x16x128xf32>
    %114 = arith.addf %107, %113 : vector<8x16x128xf32>
    %c2_83 = arith.constant 2 : index
    %c0_84 = arith.constant 0 : index
    %115 = vector.load %arg4[%c2_83, %c0_84] : memref<9x128xf32, #tpu.memory_space<vmem>>, vector<1x128xf32>
    %116 = vector.shape_cast %115 : vector<1x128xf32> to vector<128xf32>
    %c8_85 = arith.constant 8 : index
    %c2_86 = arith.constant 2 : index
    %c0_87 = arith.constant 0 : index
    %117 = vector.load %arg9[%c8_85, %c2_86, %c0_87] : memref<18x18x128xf32, #tpu.memory_space<vmem>>, vector<8x16x128xf32>
    %118 = vector.shape_cast %116 : vector<128xf32> to vector<1x1x128xf32>
    %119 = vector.broadcast %118 : vector<1x1x128xf32> to vector<8x16x128xf32>
    %120 = arith.mulf %117, %119 : vector<8x16x128xf32>
    %121 = arith.addf %114, %120 : vector<8x16x128xf32>
    %c3_88 = arith.constant 3 : index
    %c0_89 = arith.constant 0 : index
    %122 = vector.load %arg4[%c3_88, %c0_89] : memref<9x128xf32, #tpu.memory_space<vmem>>, vector<1x128xf32>
    %123 = vector.shape_cast %122 : vector<1x128xf32> to vector<128xf32>
    %c9 = arith.constant 9 : index
    %c0_90 = arith.constant 0 : index
    %c0_91 = arith.constant 0 : index
    %124 = vector.load %arg9[%c9, %c0_90, %c0_91] : memref<18x18x128xf32, #tpu.memory_space<vmem>>, vector<8x16x128xf32>
    %125 = vector.shape_cast %123 : vector<128xf32> to vector<1x1x128xf32>
    %126 = vector.broadcast %125 : vector<1x1x128xf32> to vector<8x16x128xf32>
    %127 = arith.mulf %124, %126 : vector<8x16x128xf32>
    %128 = arith.addf %121, %127 : vector<8x16x128xf32>
    %c4_92 = arith.constant 4 : index
    %c0_93 = arith.constant 0 : index
    %129 = vector.load %arg4[%c4_92, %c0_93] : memref<9x128xf32, #tpu.memory_space<vmem>>, vector<1x128xf32>
    %130 = vector.shape_cast %129 : vector<1x128xf32> to vector<128xf32>
    %c9_94 = arith.constant 9 : index
    %c1_95 = arith.constant 1 : index
    %c0_96 = arith.constant 0 : index
    %131 = vector.load %arg9[%c9_94, %c1_95, %c0_96] : memref<18x18x128xf32, #tpu.memory_space<vmem>>, vector<8x16x128xf32>
    %132 = vector.shape_cast %130 : vector<128xf32> to vector<1x1x128xf32>
    %133 = vector.broadcast %132 : vector<1x1x128xf32> to vector<8x16x128xf32>
    %134 = arith.mulf %131, %133 : vector<8x16x128xf32>
    %135 = arith.addf %128, %134 : vector<8x16x128xf32>
    %c5_97 = arith.constant 5 : index
    %c0_98 = arith.constant 0 : index
    %136 = vector.load %arg4[%c5_97, %c0_98] : memref<9x128xf32, #tpu.memory_space<vmem>>, vector<1x128xf32>
    %137 = vector.shape_cast %136 : vector<1x128xf32> to vector<128xf32>
    %c9_99 = arith.constant 9 : index
    %c2_100 = arith.constant 2 : index
    %c0_101 = arith.constant 0 : index
    %138 = vector.load %arg9[%c9_99, %c2_100, %c0_101] : memref<18x18x128xf32, #tpu.memory_space<vmem>>, vector<8x16x128xf32>
    %139 = vector.shape_cast %137 : vector<128xf32> to vector<1x1x128xf32>
    %140 = vector.broadcast %139 : vector<1x1x128xf32> to vector<8x16x128xf32>
    %141 = arith.mulf %138, %140 : vector<8x16x128xf32>
    %142 = arith.addf %135, %141 : vector<8x16x128xf32>
    %c6_102 = arith.constant 6 : index
    %c0_103 = arith.constant 0 : index
    %143 = vector.load %arg4[%c6_102, %c0_103] : memref<9x128xf32, #tpu.memory_space<vmem>>, vector<1x128xf32>
    %144 = vector.shape_cast %143 : vector<1x128xf32> to vector<128xf32>
    %c10 = arith.constant 10 : index
    %c0_104 = arith.constant 0 : index
    %c0_105 = arith.constant 0 : index
    %145 = vector.load %arg9[%c10, %c0_104, %c0_105] : memref<18x18x128xf32, #tpu.memory_space<vmem>>, vector<8x16x128xf32>
    %146 = vector.shape_cast %144 : vector<128xf32> to vector<1x1x128xf32>
    %147 = vector.broadcast %146 : vector<1x1x128xf32> to vector<8x16x128xf32>
    %148 = arith.mulf %145, %147 : vector<8x16x128xf32>
    %149 = arith.addf %142, %148 : vector<8x16x128xf32>
    %c7_106 = arith.constant 7 : index
    %c0_107 = arith.constant 0 : index
    %150 = vector.load %arg4[%c7_106, %c0_107] : memref<9x128xf32, #tpu.memory_space<vmem>>, vector<1x128xf32>
    %151 = vector.shape_cast %150 : vector<1x128xf32> to vector<128xf32>
    %c10_108 = arith.constant 10 : index
    %c1_109 = arith.constant 1 : index
    %c0_110 = arith.constant 0 : index
    %152 = vector.load %arg9[%c10_108, %c1_109, %c0_110] : memref<18x18x128xf32, #tpu.memory_space<vmem>>, vector<8x16x128xf32>
    %153 = vector.shape_cast %151 : vector<128xf32> to vector<1x1x128xf32>
    %154 = vector.broadcast %153 : vector<1x1x128xf32> to vector<8x16x128xf32>
    %155 = arith.mulf %152, %154 : vector<8x16x128xf32>
    %156 = arith.addf %149, %155 : vector<8x16x128xf32>
    %c8_111 = arith.constant 8 : index
    %c0_112 = arith.constant 0 : index
    %157 = vector.load %arg4[%c8_111, %c0_112] : memref<9x128xf32, #tpu.memory_space<vmem>>, vector<1x128xf32>
    %158 = vector.shape_cast %157 : vector<1x128xf32> to vector<128xf32>
    %c10_113 = arith.constant 10 : index
    %c2_114 = arith.constant 2 : index
    %c0_115 = arith.constant 0 : index
    %159 = vector.load %arg9[%c10_113, %c2_114, %c0_115] : memref<18x18x128xf32, #tpu.memory_space<vmem>>, vector<8x16x128xf32>
    %160 = vector.shape_cast %158 : vector<128xf32> to vector<1x1x128xf32>
    %161 = vector.broadcast %160 : vector<1x1x128xf32> to vector<8x16x128xf32>
    %162 = arith.mulf %159, %161 : vector<8x16x128xf32>
    %163 = arith.addf %156, %162 : vector<8x16x128xf32>
    %c0_116 = arith.constant 0 : index
    %c0_117 = arith.constant 0 : index
    %164 = vector.load %arg5[%c0_116, %c0_117] : memref<1x128xf32, #tpu.memory_space<vmem>>, vector<1x128xf32>
    %165 = vector.shape_cast %164 : vector<1x128xf32> to vector<1x1x128xf32>
    %166 = vector.broadcast %165 : vector<1x1x128xf32> to vector<8x16x128xf32>
    %167 = arith.addf %163, %166 : vector<8x16x128xf32>
    %cst_118 = arith.constant 0.000000e+00 : f32
    %168 = vector.broadcast %cst_118 : f32 to vector<8x16x128xf32>
    %169 = arith.maximumf %167, %168 : vector<8x16x128xf32>
    %170 = vector.shape_cast %169 : vector<8x16x128xf32> to vector<128x128xf32>
    %171 = arith.truncf %170 : vector<128x128xf32> to vector<128x128xbf16>
    %c0_119 = arith.constant 0 : index
    %c0_120 = arith.constant 0 : index
    %172 = vector.load %arg6[%c0_119, %c0_120] : memref<4x128xbf16, #tpu.memory_space<vmem>>, vector<4x128xbf16>
    %cst_121 = arith.constant dense<0.000000e+00> : vector<4x128xf32>
    %173 = tpu.matmul %172, %171, %cst_121 {dimension_numbers = #tpu.dot_dimension_numbers<[1], [1], [0], [0], [0, 0, 1, 0], [], []>} : vector<4x128xbf16>, vector<128x128xbf16>, vector<4x128xf32> -> vector<4x128xf32>
    %c0_122 = arith.constant 0 : index
    %c0_123 = arith.constant 0 : index
    %174 = vector.load %arg7[%c0_122, %c0_123] : memref<4x1xf32, #tpu.memory_space<vmem>>, vector<4x1xf32>
    %175 = vector.broadcast %174 : vector<4x1xf32> to vector<4x128xf32>
    %176 = arith.addf %173, %175 : vector<4x128xf32>
    %177 = vector.extract_strided_slice %7 {offsets = [0, 128], sizes = [4, 128], strides = [1, 1]} : vector<4x256xf32> to vector<4x128xf32>
    %178 = arith.addf %176, %177 : vector<4x128xf32>
    %c0_124 = arith.constant 0 : index
    %c0_125 = arith.constant 0 : index
    %c128 = arith.constant 128 : index
    %179 = vector.load %arg8[%c0_124, %c0_125, %c128] : memref<1x4x256xf32, #tpu.memory_space<vmem>>, vector<1x4x128xf32>
    %180 = vector.shape_cast %179 : vector<1x4x128xf32> to vector<4x128xf32>
    %181 = vector.shape_cast %178 : vector<4x128xf32> to vector<1x4x128xf32>
    tpu.vector_store %arg8[%c0_124, %c0_125, %c128], %181 {strides = array<i32>} : memref<1x4x256xf32, #tpu.memory_space<vmem>>, vector<1x4x128xf32>,
    return
  }
  func.func @transform_0(%arg0: i32) -> (i32, i32, i32) {
    %c0_i32 = arith.constant 0 : i32
    %c0_i32_0 = arith.constant 0 : i32
    %c0_i32_1 = arith.constant 0 : i32
    return %arg0, %c0_i32, %c0_i32_0 : i32, i32, i32
  }
  func.func @transform_1(%arg0: i32) -> (i32, i32) {
    %c0_i32 = arith.constant 0 : i32
    %c0_i32_0 = arith.constant 0 : i32
    %c0_i32_1 = arith.constant 0 : i32
    return %c0_i32, %c0_i32_0 : i32, i32
  }
  func.func @transform_2(%arg0: i32) -> (i32, i32) {
    %c0_i32 = arith.constant 0 : i32
    %c0_i32_0 = arith.constant 0 : i32
    %c0_i32_1 = arith.constant 0 : i32
    return %c0_i32, %c0_i32_0 : i32, i32
  }
  func.func @transform_3(%arg0: i32) -> (i32, i32) {
    %c0_i32 = arith.constant 0 : i32
    %c0_i32_0 = arith.constant 0 : i32
    %c0_i32_1 = arith.constant 0 : i32
    return %c0_i32, %c0_i32_0 : i32, i32
  }
  func.func @transform_4(%arg0: i32) -> (i32, i32) {
    %c0_i32 = arith.constant 0 : i32
    %c0_i32_0 = arith.constant 0 : i32
    %c0_i32_1 = arith.constant 0 : i32
    return %c0_i32, %c0_i32_0 : i32, i32
  }
  func.func @transform_5(%arg0: i32) -> (i32, i32) {
    %c0_i32 = arith.constant 0 : i32
    %c0_i32_0 = arith.constant 0 : i32
    %c0_i32_1 = arith.constant 0 : i32
    return %c0_i32, %c0_i32_0 : i32, i32
  }
  func.func @transform_6(%arg0: i32) -> (i32, i32) {
    %c0_i32 = arith.constant 0 : i32
    %c0_i32_0 = arith.constant 0 : i32
    %c0_i32_1 = arith.constant 0 : i32
    return %c0_i32, %c0_i32_0 : i32, i32
  }
  func.func @transform_7(%arg0: i32) -> (i32, i32, i32) {
    %c0_i32 = arith.constant 0 : i32
    %c0_i32_0 = arith.constant 0 : i32
    %c0_i32_1 = arith.constant 0 : i32
    return %arg0, %c0_i32, %c0_i32_0 : i32, i32, i32
  }
}

</mosaic_0001>

<llo_original>
// kernel: tpu_custom_call.1
$region0: #{tpu_custom_call.1}
  #allocation0 [shape = 'u32[]', space=smem, size = 0x4, offset = 0x4, fixed_abs, tag = 'smem constant byte address 0x4 - core index']
  #allocation1 [shape = 'u32[144,128]{1,0:T(1,128)}', space=vmem, size = 0x12000, scoped, tag = 'internal scratch']
  #allocation2 [shape = 'f32[18,18,128]{2,1,0:T(8,128)}', space=vmem, size = 0x36000, scoped, tag = 'scratch operand']
  %s0 = inlined_call_operand.hbm [shape: f32[2,4,256], index: 0, kind: input, shape index: {}]
  %s1 = inlined_call_operand.hbm [shape: bf16[4,128], index: 1, kind: input, shape index: {}]
  %s2 = inlined_call_operand.hbm [shape: f32[1,128], index: 2, kind: input, shape index: {}]
  %s3 = inlined_call_operand.vmem [shape: f32[9,128], index: 3, kind: input, shape index: {}]
  %s4 = inlined_call_operand.vmem [shape: f32[1,128], index: 4, kind: input, shape index: {}]
  %s5 = inlined_call_operand.vmem [shape: bf16[4,128], index: 5, kind: input, shape index: {}]
  %s6 = inlined_call_operand.vmem [shape: f32[4,1], index: 6, kind: input, shape index: {}]
  %s7 = inlined_call_operand.hbm [shape: f32[2,4,256], index: 7, kind: output, shape index: {}]
  %s8 = sld [smem:[#allocation0]]
  $region73: #{tpu_custom_call.1} parent=0
    _
  %s10 = ssub.s32 1, %s8
  %s11 = scalar_select 0, %s10, %s8
  $region1: #{tpu_custom_call.1} parent=0
    #allocation3 [shape = 'u8[8192]{0}', space=vmem, size = 0x2000, scoped, tag = 'input window, operand 0']
    #allocation4 [shape = 's32[2]{0}', space=sflag, size = 0x8, scoped, tag = 'scoped memory for tpu_custom_call.1']
    #allocation5 [shape = 's32[2]{0}', space=sflag, size = 0x8, scoped, tag = 'scoped memory for tpu_custom_call.1']
    #allocation6 [shape = 'u8[1024]{0}', space=vmem, size = 0x400, scoped, tag = 'input window, operand 1, single buffered']
    #allocation7 [shape = 's32[1]{0}', space=sflag, size = 0x4, scoped, tag = 'scoped memory for tpu_custom_call.1']
    #allocation8 [shape = 'u8[512]{0}', space=vmem, size = 0x400, scoped, tag = 'input window, operand 2, single buffered']
    #allocation9 [shape = 'u8[8192]{0}', space=vmem, size = 0x2000, scoped, tag = 'output window, operand 0']
    %12 = vsyncpa [#allocation4], 0
    %s13 = scalar_lea.sflag [#allocation4], 1
    %14 = vsyncpa %s13, 0
    %15 = vsyncpa [#allocation7], 0
    %16 = vsyncpa [#allocation5], 0
    %s17 = scalar_lea.sflag [#allocation5], 1
    %18 = vsyncpa %s17, 0
    loop: start=0, step=1, limit=4
    $region2: #{tpu_custom_call.1} parent=1 // loop_pre_header
      _
    $region3: #{tpu_custom_call.1} parent=1 // loop_header
      %s20 = sphi 0, %s24
      %p21 = scmp.ge.s32.totalorder %s20, 4
      %s30 = sphi 0, %s32
      %s33 = sphi 0, %s30
      %s34 = sphi 0, %s33
      %s50 = sphi 0, %s34
      %s54 = sphi 0, %s54
      %s56 = sphi 0, %s54
      %s57 = sphi 0, %s56
      %s71 = sphi 0, %s57
      %s75 = sphi 0, %s75
      %s77 = sphi 0, %s75
      %s78 = sphi 0, %s77
      %s92 = sphi 0, %s78
      %s96 = sphi 0, %s96
      %s98 = sphi 0, %s96
      %s99 = sphi 0, %s98
      %s113 = sphi 0, %s99
      %s117 = sphi 0, %s117
      %s119 = sphi 0, %s117
      %s120 = sphi 0, %s119
      %s134 = sphi 0, %s120
      %s138 = sphi 0, %s138
      %s140 = sphi 0, %s138
      %s141 = sphi 0, %s140
      %s155 = sphi 0, %s141
      %s159 = sphi 0, %s159
      %s161 = sphi 0, %s159
      %s162 = sphi 0, %s161
      %s176 = sphi 0, %s162
      %s182 = sphi 0, %s184
      %s185 = sphi 0, %s182
      %s186 = sphi 0, %s185
      %s202 = sphi 0, %s186
    $region4: #{tpu_custom_call.1} parent=1 // loop_header_branch
      %23 = sbr.rel (%p21) target = $region8
    $region5: #{tpu_custom_call.1} parent=1 // loop_body
      %s25 = ssub.s32 %s20, 1
      %s26 = ssub.s32 %s20, 2
      %s27 = sadd.s32 %s20, 1
      %s28 = ssub.s32 %s20, %s27
      %p29 = scmp.eq.s32.totalorder %s28, 0
      %s31 = sadd.s32 %s30, 1
      %s32 = scalar_select %p29, %s30, %s31
      %p35 = pneg %p29
      %p36 = scmp.eq.s32.totalorder %s20, 1
      %p37 = por %p35, %p36
      %p38 = scmp.ne.s32.totalorder %s30, %s33
      %p39 = scmp.eq.s32.totalorder %s20, 0
      %p40 = por %p38, %p39
      %p41 = scmp.ne.s32.totalorder %s30, %s33
      %p42 = scmp.eq.s32.totalorder %s25, 1
      %p43 = por %p41, %p42
      %p44 = scmp.ne.s32.totalorder %s33, %s34
      %p45 = scmp.eq.s32.totalorder %s25, 0
      %p46 = por %p44, %p45
      %p47 = scmp.ne.s32.totalorder %s33, %s34
      %p48 = scmp.eq.s32.totalorder %s26, 1
      %p49 = por %p47, %p48
      %p51 = scmp.ne.s32.totalorder %s34, %s50
      %p52 = scmp.eq.s32.totalorder %s26, 0
      %p53 = por %p51, %p52
      %s55 = sadd.s32 %s54, 1
      %p58 = scmp.eq.s32.totalorder %s20, 1
      %p59 = scmp.ne.s32.totalorder %s54, %s56
      %p60 = scmp.eq.s32.totalorder %s20, 0
      %p61 = por %p59, %p60
      %p62 = scmp.ne.s32.totalorder %s54, %s56
      %p63 = scmp.eq.s32.totalorder %s25, 1
      %p64 = por %p62, %p63
      %p65 = scmp.ne.s32.totalorder %s56, %s57
      %p66 = scmp.eq.s32.totalorder %s25, 0
      %p67 = por %p65, %p66
      %p68 = scmp.ne.s32.totalorder %s56, %s57
      %p69 = scmp.eq.s32.totalorder %s26, 1
      %p70 = por %p68, %p69
      %p72 = scmp.ne.s32.totalorder %s57, %s71
      %p73 = scmp.eq.s32.totalorder %s26, 0
      %p74 = por %p72, %p73
      %s76 = sadd.s32 %s75, 1
      %p79 = scmp.eq.s32.totalorder %s20, 1
      %p80 = scmp.ne.s32.totalorder %s75, %s77
      %p81 = scmp.eq.s32.totalorder %s20, 0
      %p82 = por %p80, %p81
      %p83 = scmp.ne.s32.totalorder %s75, %s77
      %p84 = scmp.eq.s32.totalorder %s25, 1
      %p85 = por %p83, %p84
      %p86 = scmp.ne.s32.totalorder %s77, %s78
      %p87 = scmp.eq.s32.totalorder %s25, 0
      %p88 = por %p86, %p87
      %p89 = scmp.ne.s32.totalorder %s77, %s78
      %p90 = scmp.eq.s32.totalorder %s26, 1
      %p91 = por %p89, %p90
      %p93 = scmp.ne.s32.totalorder %s78, %s92
      %p94 = scmp.eq.s32.totalorder %s26, 0
      %p95 = por %p93, %p94
      %s97 = sadd.s32 %s96, 1
      %p100 = scmp.eq.s32.totalorder %s20, 1
      %p101 = scmp.ne.s32.totalorder %s96, %s98
      %p102 = scmp.eq.s32.totalorder %s20, 0
      %p103 = por %p101, %p102
      %p104 = scmp.ne.s32.totalorder %s96, %s98
      %p105 = scmp.eq.s32.totalorder %s25, 1
      %p106 = por %p104, %p105
      %p107 = scmp.ne.s32.totalorder %s98, %s99
      %p108 = scmp.eq.s32.totalorder %s25, 0
      %p109 = por %p107, %p108
      %p110 = scmp.ne.s32.totalorder %s98, %s99
      %p111 = scmp.eq.s32.totalorder %s26, 1
      %p112 = por %p110, %p111
      %p114 = scmp.ne.s32.totalorder %s99, %s113
      %p115 = scmp.eq.s32.totalorder %s26, 0
      %p116 = por %p114, %p115
      %s118 = sadd.s32 %s117, 1
      %p121 = scmp.eq.s32.totalorder %s20, 1
      %p122 = scmp.ne.s32.totalorder %s117, %s119
      %p123 = scmp.eq.s32.totalorder %s20, 0
      %p124 = por %p122, %p123
      %p125 = scmp.ne.s32.totalorder %s117, %s119
      %p126 = scmp.eq.s32.totalorder %s25, 1
      %p127 = por %p125, %p126
      %p128 = scmp.ne.s32.totalorder %s119, %s120
      %p129 = scmp.eq.s32.totalorder %s25, 0
      %p130 = por %p128, %p129
      %p131 = scmp.ne.s32.totalorder %s119, %s120
      %p132 = scmp.eq.s32.totalorder %s26, 1
      %p133 = por %p131, %p132
      %p135 = scmp.ne.s32.totalorder %s120, %s134
      %p136 = scmp.eq.s32.totalorder %s26, 0
      %p137 = por %p135, %p136
      %s139 = sadd.s32 %s138, 1
      %p142 = scmp.eq.s32.totalorder %s20, 1
      %p143 = scmp.ne.s32.totalorder %s138, %s140
      %p144 = scmp.eq.s32.totalorder %s20, 0
      %p145 = por %p143, %p144
      %p146 = scmp.ne.s32.totalorder %s138, %s140
      %p147 = scmp.eq.s32.totalorder %s25, 1
      %p148 = por %p146, %p147
      %p149 = scmp.ne.s32.totalorder %s140, %s141
      %p150 = scmp.eq.s32.totalorder %s25, 0
      %p151 = por %p149, %p150
      %p152 = scmp.ne.s32.totalorder %s140, %s141
      %p153 = scmp.eq.s32.totalorder %s26, 1
      %p154 = por %p152, %p153
      %p156 = scmp.ne.s32.totalorder %s141, %s155
      %p157 = scmp.eq.s32.totalorder %s26, 0
      %p158 = por %p156, %p157
      %s160 = sadd.s32 %s159, 1
      %p163 = scmp.eq.s32.totalorder %s20, 1
      %p164 = scmp.ne.s32.totalorder %s159, %s161
      %p165 = scmp.eq.s32.totalorder %s20, 0
      %p166 = por %p164, %p165
      %p167 = scmp.ne.s32.totalorder %s159, %s161
      %p168 = scmp.eq.s32.totalorder %s25, 1
      %p169 = por %p167, %p168
      %p170 = scmp.ne.s32.totalorder %s161, %s162
      %p171 = scmp.eq.s32.totalorder %s25, 0
      %p172 = por %p170, %p171
      %p173 = scmp.ne.s32.totalorder %s161, %s162
      %p174 = scmp.eq.s32.totalorder %s26, 1
      %p175 = por %p173, %p174
      %p177 = scmp.ne.s32.totalorder %s162, %s176
      %p178 = scmp.eq.s32.totalorder %s26, 0
      %p179 = por %p177, %p178
      %s180 = ssub.s32 %s20, %s27
      %p181 = scmp.eq.s32.totalorder %s180, 0
      %s183 = sadd.s32 %s182, 1
      %s184 = scalar_select %p181, %s182, %s183
      %p187 = pneg %p181
      %p188 = scmp.eq.s32.totalorder %s20, 1
      %p189 = por %p187, %p188
      %p190 = scmp.ne.s32.totalorder %s182, %s185
      %p191 = scmp.eq.s32.totalorder %s20, 0
      %p192 = por %p190, %p191
      %p193 = scmp.ne.s32.totalorder %s182, %s185
      %p194 = scmp.eq.s32.totalorder %s25, 1
      %p195 = por %p193, %p194
      %p196 = scmp.ne.s32.totalorder %s185, %s186
      %p197 = scmp.eq.s32.totalorder %s25, 0
      %p198 = por %p196, %p197
      %p199 = scmp.ne.s32.totalorder %s185, %s186
      %p200 = scmp.eq.s32.totalorder %s26, 1
      %p201 = por %p199, %p200
      %p203 = scmp.ne.s32.totalorder %s186, %s202
      %p204 = scmp.eq.s32.totalorder %s26, 0
      %p205 = por %p203, %p204
      %p206 = scmp.le.s32.totalorder 1, %s20
      %p207 = scmp.lt.s32.totalorder %s20, 3
      %p208 = pnand %p206, %p207
      %p209 = pneg %p208
      // Predicated region
      $region9: #{tpu_custom_call.1} parent=5 // pred_check
        _
      $region10: #{tpu_custom_call.1} parent=5 // pred_check_branch
        %211 = sbr.rel (%p208) target = $region12
      $region11: #{tpu_custom_call.1} parent=5 // pred_region
        %s212 = ssub.s32 %s20, 1
        // Predicated region
        $region13: #{tpu_custom_call.1} parent=11 // pred_check
          %p213 = pneg %p67
        $region14: #{tpu_custom_call.1} parent=11 // pred_check_branch
          %215 = sbr.rel (%p213) target = $region16
        $region15: #{tpu_custom_call.1} parent=11 // pred_region
          %s217 = ssub.s32 32, 32
          %218 = vsyncadd [#allocation7], %s217
          %s220 = sshll.u32 [#allocation6], 4
          %s221 = int_to_ptr.vmem [resolvable:$true] %s220
          %223 = dma.hbm_to_vmem [thread:$0]  %s1, 32, %s221, [#allocation7]
        $region16: #{tpu_custom_call.1} parent=11 // pred_fallthru
          _
        // Predicated region
        $region17: #{tpu_custom_call.1} parent=11 // pred_check
          %p224 = pneg %p88
        $region18: #{tpu_custom_call.1} parent=11 // pred_check_branch
          %226 = sbr.rel (%p224) target = $region20
        $region19: #{tpu_custom_call.1} parent=11 // pred_region
          %s228 = ssub.s32 16, 16
          %229 = vsyncadd [#allocation7], %s228
          %s231 = sshll.u32 [#allocation8], 4
          %s232 = int_to_ptr.vmem [resolvable:$true] %s231
          %234 = dma.hbm_to_vmem [thread:$0]  %s2, 16, %s232, [#allocation7]
        $region20: #{tpu_custom_call.1} parent=11 // pred_fallthru
          _
        // Predicated region
        $region21: #{tpu_custom_call.1} parent=11 // pred_check
          %p235 = pneg %p109
        $region22: #{tpu_custom_call.1} parent=11 // pred_check_branch
          %237 = sbr.rel (%p235) target = $region24
        $region23: #{tpu_custom_call.1} parent=11 // pred_region
          _
        $region24: #{tpu_custom_call.1} parent=11 // pred_fallthru
          _
        // Predicated region
        $region25: #{tpu_custom_call.1} parent=11 // pred_check
          %p238 = pneg %p130
        $region26: #{tpu_custom_call.1} parent=11 // pred_check_branch
          %240 = sbr.rel (%p238) target = $region28
        $region27: #{tpu_custom_call.1} parent=11 // pred_region
          _
        $region28: #{tpu_custom_call.1} parent=11 // pred_fallthru
          _
        // Predicated region
        $region29: #{tpu_custom_call.1} parent=11 // pred_check
          %p241 = pneg %p151
        $region30: #{tpu_custom_call.1} parent=11 // pred_check_branch
          %243 = sbr.rel (%p241) target = $region32
        $region31: #{tpu_custom_call.1} parent=11 // pred_region
          _
        $region32: #{tpu_custom_call.1} parent=11 // pred_fallthru
          _
        // Predicated region
        $region33: #{tpu_custom_call.1} parent=11 // pred_check
          %p244 = pneg %p172
        $region34: #{tpu_custom_call.1} parent=11 // pred_check_branch
          %246 = sbr.rel (%p244) target = $region36
        $region35: #{tpu_custom_call.1} parent=11 // pred_region
          _
        $region36: #{tpu_custom_call.1} parent=11 // pred_fallthru
          _
      $region12: #{tpu_custom_call.1} parent=5 // pred_fallthru
        _
      %p247 = scmp.lt.s32.totalorder %s20, 2
      // Predicated region
      $region37: #{tpu_custom_call.1} parent=5 // pred_check
        %p248 = pneg %p247
      $region38: #{tpu_custom_call.1} parent=5 // pred_check_branch
        %250 = sbr.rel (%p248) target = $region40
      $region39: #{tpu_custom_call.1} parent=5 // pred_region
        // Predicated region
        $region41: #{tpu_custom_call.1} parent=39 // pred_check
          %p251 = pneg %p40
        $region42: #{tpu_custom_call.1} parent=39 // pred_check_branch
          %253 = sbr.rel (%p251) target = $region44
        $region43: #{tpu_custom_call.1} parent=39 // pred_region
          %s254 = sand.u32 %s30, 1
          %s255 = scalar_lea.sflag [#allocation4], %s254
          %s256 = sand.u32 %s30, 1
          %s257 = smul.addr %s256, 8
          %s258 = scalar_lea.vmem [#allocation3], %s257
          %s260 = ssub.s32 128, 128
          %261 = vsyncadd %s255, %s260
          %s262 = smul.addr %s20, 2
          %s263 = smul.addr %s262, 64
          %s264 = scalar_lea.hbm %s0, %s263
          %s266 = sshll.u32 %s258, 4
          %s267 = int_to_ptr.vmem [resolvable:$true] %s266
          %269 = dma.hbm_to_vmem [thread:$0]  %s264, 128, %s267, %s255
        $region44: #{tpu_custom_call.1} parent=39 // pred_fallthru
          _
      $region40: #{tpu_custom_call.1} parent=5 // pred_fallthru
        _
      %p270 = scmp.le.s32.totalorder 1, %s20
      %p271 = scmp.lt.s32.totalorder %s20, 3
      %p272 = pnand %p270, %p271
      %p273 = pneg %p272
      // Predicated region
      $region45: #{tpu_custom_call.1} parent=5 // pred_check
        _
      $region46: #{tpu_custom_call.1} parent=5 // pred_check_branch
        %275 = sbr.rel (%p272) target = $region48
      $region47: #{tpu_custom_call.1} parent=5 // pred_region
        %s276 = ssub.s32 %s20, 1
        %s277 = sand.u32 %s33, 1
        %s278 = scalar_lea.sflag [#allocation4], %s277
        %s279 = sand.u32 %s33, 1
        %s280 = smul.addr %s279, 8
        %s281 = scalar_lea.vmem [#allocation3], %s280
        // Predicated region
        $region49: #{tpu_custom_call.1} parent=47 // pred_check
          %p282 = pneg %p46
        $region50: #{tpu_custom_call.1} parent=47 // pred_check_branch
          %284 = sbr.rel (%p282) target = $region52
        $region51: #{tpu_custom_call.1} parent=47 // pred_region
          %285 = dma.done %s278, 128
        $region52: #{tpu_custom_call.1} parent=47 // pred_fallthru
          _
        // Predicated region
        $region53: #{tpu_custom_call.1} parent=47 // pred_check
          %p286 = pneg %p67
        $region54: #{tpu_custom_call.1} parent=47 // pred_check_branch
          %288 = sbr.rel (%p286) target = $region56
        $region55: #{tpu_custom_call.1} parent=47 // pred_region
          %289 = dma.done [#allocation7], 32
        $region56: #{tpu_custom_call.1} parent=47 // pred_fallthru
          _
        // Predicated region
        $region57: #{tpu_custom_call.1} parent=47 // pred_check
          %p290 = pneg %p88
        $region58: #{tpu_custom_call.1} parent=47 // pred_check_branch
          %292 = sbr.rel (%p290) target = $region60
        $region59: #{tpu_custom_call.1} parent=47 // pred_region
          %293 = dma.done [#allocation7], 16
        $region60: #{tpu_custom_call.1} parent=47 // pred_fallthru
          _
        %s294 = sand.u32 %s33, 1
        %s295 = scalar_lea.sflag [#allocation4], %s294
        %s296 = sand.u32 %s33, 1
        %s297 = smul.addr %s296, 8
        %s298 = scalar_lea.vmem [#allocation3], %s297
        %p299 = pneg %p46
        %p300 = pneg %p43
        %p301 = pneg %p67
        %p302 = pneg %p64
        %p303 = pneg %p88
        %p304 = pneg %p85
        %p305 = pneg %p109
        %p306 = pneg %p106
        %p307 = pneg %p130
        %p308 = pneg %p127
        %p309 = pneg %p151
        %p310 = pneg %p148
        %p311 = pneg %p172
        %p312 = pneg %p169
        %p313 = pneg %p198
        %p314 = pneg %p195
        %s315 = sand.u32 %s185, 1
        %s316 = scalar_lea.sflag [#allocation5], %s315
        %s317 = sand.u32 %s185, 1
        %s318 = smul.addr %s317, 8
        %s319 = scalar_lea.vmem [#allocation9], %s318
        %321 = vst [vmem:[#allocation2] sm:$0xff] 0.0
        %322 = vst [vmem:[#allocation2 + $0x8] sm:$0xff] 0.0
        %323 = vst [vmem:[#allocation2 + $0x10] sm:$0x3] 0.0
        %s324 = scalar_lea.vmem [#allocation2], 408
        %325 = vst [vmem:[%s324] sm:$0xff] 0.0
        %326 = vst [vmem:[%s324 + $0x8] sm:$0xff] 0.0
        %327 = vst [vmem:[%s324 + $0x10] sm:$0x3] 0.0
        %s328 = scalar_lea.vmem [#allocation2], 24
        %329 = vst [vmem:[%s328] sm:$0x1] 0.0
        %330 = vst [vmem:[%s328 + $0x18] sm:$0x1] 0.0
        %331 = vst [vmem:[%s328 + $0x30] sm:$0x1] 0.0
        %332 = vst [vmem:[%s328 + $0x48] sm:$0x1] 0.0
        %333 = vst [vmem:[%s328 + $0x60] sm:$0x1] 0.0
        %334 = vst [vmem:[%s328 + $0x78] sm:$0x1] 0.0
        %335 = vst [vmem:[%s328 + $0x90] sm:$0x1] 0.0
        %336 = vst [vmem:[%s328 + $0xa8] sm:$0x1] 0.0
        %337 = vst [vmem:[%s328 + $0xc0] sm:$0x1] 0.0
        %338 = vst [vmem:[%s328 + $0xd8] sm:$0x1] 0.0
        %339 = vst [vmem:[%s328 + $0xf0] sm:$0x1] 0.0
        %340 = vst [vmem:[%s328 + $0x108] sm:$0x1] 0.0
        %341 = vst [vmem:[%s328 + $0x120] sm:$0x1] 0.0
        %342 = vst [vmem:[%s328 + $0x138] sm:$0x1] 0.0
        %343 = vst [vmem:[%s328 + $0x150] sm:$0x1] 0.0
        %344 = vst [vmem:[%s328 + $0x168] sm:$0x1] 0.0
        %345 = vst [vmem:[%s328 + $0x11] sm:$0x1] 0.0
        %346 = vst [vmem:[%s328 + $0x29] sm:$0x1] 0.0
        %347 = vst [vmem:[%s328 + $0x41] sm:$0x1] 0.0
        %348 = vst [vmem:[%s328 + $0x59] sm:$0x1] 0.0
        %349 = vst [vmem:[%s328 + $0x71] sm:$0x1] 0.0
        %350 = vst [vmem:[%s328 + $0x89] sm:$0x1] 0.0
        %351 = vst [vmem:[%s328 + $0xa1] sm:$0x1] 0.0
        %352 = vst [vmem:[%s328 + $0xb9] sm:$0x1] 0.0
        %353 = vst [vmem:[%s328 + $0xd1] sm:$0x1] 0.0
        %354 = vst [vmem:[%s328 + $0xe9] sm:$0x1] 0.0
        %355 = vst [vmem:[%s328 + $0x101] sm:$0x1] 0.0
        %356 = vst [vmem:[%s328 + $0x119] sm:$0x1] 0.0
        %357 = vst [vmem:[%s328 + $0x131] sm:$0x1] 0.0
        %358 = vst [vmem:[%s328 + $0x149] sm:$0x1] 0.0
        %359 = vst [vmem:[%s328 + $0x161] sm:$0x1] 0.0
        %360 = vst [vmem:[%s328 + $0x179] sm:$0x1] 0.0
        %v361 = vld [vmem:[%s281] sm:$0xff]
        %v363 = vcombine.high %v361, %v361
        %v365 = vpack.c.bf16 %v361, %v361
        %v366 = vpack.c.bf16 %v363, %v363
        %v367 = vld [vmem:[#allocation6] sm:$0x3]
        %v368 = vld [vmem:[#allocation8] sm:$0x1]
        %v370 = vlaneseq
        %v371 = vshrl.u32 %v370, 7
        %v372 = vsub.s32 0, %v371
        %v373 = vrot.slane %v368, %v372
        %375 = vxpose.xlu0.c.b16.start [1/8] %v365, 128
        %376 = vxpose.xlu0.c.b16.cont [2/8] 0, 128
        %377 = vxpose.xlu0.c.b16.cont [3/8] 0, 128
        %378 = vxpose.xlu0.c.b16.cont [4/8] 0, 128
        %379 = vxpose.xlu0.c.b16.cont [5/8] 0, 128
        %380 = vxpose.xlu0.c.b16.cont [6/8] 0, 128
        %381 = vxpose.xlu0.c.b16.cont [7/8] 0, 128
        %382 = vxpose.xlu0.c.b16.end [8/8] 0, 128
        %v383 = vpop.trf.xlu0
        %v384 = vpop.trf.xlu0
        %v385 = vpop.trf.xlu0
        %v386 = vpop.trf.xlu0
        %v387 = vpop.trf.xlu0
        %v388 = vpop.trf.xlu0
        %v389 = vpop.trf.xlu0
        %v390 = vpop.trf.xlu0
        %391 = vxpose.xlu0.c.b16.start [1/8] %v366, 128
        %392 = vxpose.xlu0.c.b16.cont [2/8] 0, 128
        %393 = vxpose.xlu0.c.b16.cont [3/8] 0, 128
        %394 = vxpose.xlu0.c.b16.cont [4/8] 0, 128
        %395 = vxpose.xlu0.c.b16.cont [5/8] 0, 128
        %396 = vxpose.xlu0.c.b16.cont [6/8] 0, 128
        %397 = vxpose.xlu0.c.b16.cont [7/8] 0, 128
        %398 = vxpose.xlu0.c.b16.end [8/8] 0, 128
        %v399 = vpop.trf.xlu0
        %v400 = vpop.trf.xlu0
        %v401 = vpop.trf.xlu0
        %v402 = vpop.trf.xlu0
        %v403 = vpop.trf.xlu0
        %v404 = vpop.trf.xlu0
        %v405 = vpop.trf.xlu0
        %v406 = vpop.trf.xlu0
        %vm407 = vcmask 31744
        %v409 = vsel %vm407, %v383, 0
        %v412 = vsel %vm407, %v384, 0
        %v415 = vsel %vm407, %v385, 0
        %v418 = vsel %vm407, %v386, 0
        %v421 = vsel %vm407, %v387, 0
        %v424 = vsel %vm407, %v388, 0
        %v427 = vsel %vm407, %v389, 0
        %v430 = vsel %vm407, %v390, 0
        %v433 = vsel %vm407, %v399, 0
        %v436 = vsel %vm407, %v400, 0
        %v439 = vsel %vm407, %v401, 0
        %v442 = vsel %vm407, %v402, 0
        %v445 = vsel %vm407, %v403, 0
        %v448 = vsel %vm407, %v404, 0
        %v451 = vsel %vm407, %v405, 0
        %v454 = vsel %vm407, %v406, 0
        %vm456 = vcmask 1041408
        %v458 = vsel %vm456, %v367, 0
        %460 = vmatprep.subr.bf16.mxu0 0
        %461 = vmatpush1.bf16.msra.mxu0 %v458
        %462 = vmatprep.subr.bf16.mxu0 0
        %463 = vmatpush1.bf16.msra.mxu0 0
        %464 = vmatprep.subr.bf16.mxu0 0
        %465 = vmatpush1.bf16.msra.mxu0 0
        %466 = vmatprep.subr.bf16.mxu0 0
        %467 = vmatpush1.bf16.msra.mxu0 0
        %468 = vmatprep.subr.bf16.mxu0 0
        %469 = vmatpush1.bf16.msra.mxu0 0
        %470 = vmatprep.subr.bf16.mxu0 0
        %471 = vmatpush1.bf16.msra.mxu0 0
        %472 = vmatprep.subr.bf16.mxu0 0
        %473 = vmatpush1.bf16.msra.mxu0 0
        %474 = vmatprep.subr.bf16.mxu0 0
        %475 = vmatpush1.bf16.msra.mxu0 0
        %476 = vmatprep.subr.bf16.mxu0 0
        %477 = vmatpush1.bf16.msra.mxu0 0
        %478 = vmatprep.subr.bf16.mxu0 0
        %479 = vmatpush1.bf16.msra.mxu0 0
        %480 = vmatprep.subr.bf16.mxu0 0
        %481 = vmatpush1.bf16.msra.mxu0 0
        %482 = vmatprep.subr.bf16.mxu0 0
        %483 = vmatpush1.bf16.msra.mxu0 0
        %484 = vmatprep.subr.bf16.mxu0 0
        %485 = vmatpush1.bf16.msra.mxu0 0
        %486 = vmatprep.subr.bf16.mxu0 0
        %487 = vmatpush1.bf16.msra.mxu0 0
        %488 = vmatprep.subr.bf16.mxu0 0
        %489 = vmatpush1.bf16.msra.mxu0 0
        %490 = vmatprep.subr.bf16.mxu0 0
        %491 = vmatpush1.bf16.msra.mxu0 0
        %492 = vmatprep.mubr.bf16.mxu0 0
        %493 = vmatmul.mubr.bf16.gmra.mrb[0].mxu0 %v409
        %v494 = vpop.f32.mrb[0].mxu0
        %v495 = vadd.f32 %v373, %v494
        %v496 = vpop.f32.mrb[0].mxu0
        %v497 = vpop.f32.mrb[0].mxu0
        %v498 = vadd.f32 %v373, %v497
        %v499 = vpop.f32.mrb[0].mxu0
        %500 = vmatprep.mubr.bf16.mxu0 0
        %501 = vmatmul.mubr.bf16.gmra.mrb[0].mxu0 %v412
        %v502 = vpop.f32.mrb[0].mxu0
        %v503 = vadd.f32 %v373, %v502
        %v504 = vpop.f32.mrb[0].mxu0
        %v505 = vpop.f32.mrb[0].mxu0
        %v506 = vadd.f32 %v373, %v505
        %v507 = vpop.f32.mrb[0].mxu0
        %508 = vmatprep.mubr.bf16.mxu0 0
        %509 = vmatmul.mubr.bf16.gmra.mrb[0].mxu0 %v415
        %v510 = vpop.f32.mrb[0].mxu0
        %v511 = vadd.f32 %v373, %v510
        %v512 = vpop.f32.mrb[0].mxu0
        %v513 = vpop.f32.mrb[0].mxu0
        %v514 = vadd.f32 %v373, %v513
        %v515 = vpop.f32.mrb[0].mxu0
        %516 = vmatprep.mubr.bf16.mxu0 0
        %517 = vmatmul.mubr.bf16.gmra.mrb[0].mxu0 %v418
        %v518 = vpop.f32.mrb[0].mxu0
        %v519 = vadd.f32 %v373, %v518
        %v520 = vpop.f32.mrb[0].mxu0
        %v521 = vpop.f32.mrb[0].mxu0
        %v522 = vadd.f32 %v373, %v521
        %v523 = vpop.f32.mrb[0].mxu0
        %524 = vmatprep.mubr.bf16.mxu0 0
        %525 = vmatmul.mubr.bf16.gmra.mrb[0].mxu0 %v421
        %v526 = vpop.f32.mrb[0].mxu0
        %v527 = vadd.f32 %v373, %v526
        %v528 = vpop.f32.mrb[0].mxu0
        %v529 = vpop.f32.mrb[0].mxu0
        %v530 = vadd.f32 %v373, %v529
        %v531 = vpop.f32.mrb[0].mxu0
        %532 = vmatprep.mubr.bf16.mxu0 0
        %533 = vmatmul.mubr.bf16.gmra.mrb[0].mxu0 %v424
        %v534 = vpop.f32.mrb[0].mxu0
        %v535 = vadd.f32 %v373, %v534
        %v536 = vpop.f32.mrb[0].mxu0
        %v537 = vpop.f32.mrb[0].mxu0
        %v538 = vadd.f32 %v373, %v537
        %v539 = vpop.f32.mrb[0].mxu0
        %540 = vmatprep.mubr.bf16.mxu0 0
        %541 = vmatmul.mubr.bf16.gmra.mrb[0].mxu0 %v427
        %v542 = vpop.f32.mrb[0].mxu0
        %v543 = vadd.f32 %v373, %v542
        %v544 = vpop.f32.mrb[0].mxu0
        %v545 = vpop.f32.mrb[0].mxu0
        %v546 = vadd.f32 %v373, %v545
        %v547 = vpop.f32.mrb[0].mxu0
        %548 = vmatprep.mubr.bf16.mxu0 0
        %549 = vmatmul.mubr.bf16.gmra.mrb[0].mxu0 %v430
        %v550 = vpop.f32.mrb[0].mxu0
        %v551 = vadd.f32 %v373, %v550
        %v552 = vpop.f32.mrb[0].mxu0
        %v553 = vpop.f32.mrb[0].mxu0
        %v554 = vadd.f32 %v373, %v553
        %v555 = vpop.f32.mrb[0].mxu0
        %556 = vmatprep.mubr.bf16.mxu0 0
        %557 = vmatmul.mubr.bf16.gmra.mrb[0].mxu0 %v433
        %v558 = vpop.f32.mrb[0].mxu0
        %v559 = vadd.f32 %v373, %v558
        %v560 = vpop.f32.mrb[0].mxu0
        %v561 = vpop.f32.mrb[0].mxu0
        %v562 = vadd.f32 %v373, %v561
        %v563 = vpop.f32.mrb[0].mxu0
        %564 = vmatprep.mubr.bf16.mxu0 0
        %565 = vmatmul.mubr.bf16.gmra.mrb[0].mxu0 %v436
        %v566 = vpop.f32.mrb[0].mxu0
        %v567 = vadd.f32 %v373, %v566
        %v568 = vpop.f32.mrb[0].mxu0
        %v569 = vpop.f32.mrb[0].mxu0
        %v570 = vadd.f32 %v373, %v569
        %v571 = vpop.f32.mrb[0].mxu0
        %572 = vmatprep.mubr.bf16.mxu0 0
        %573 = vmatmul.mubr.bf16.gmra.mrb[0].mxu0 %v439
        %v574 = vpop.f32.mrb[0].mxu0
        %v575 = vadd.f32 %v373, %v574
        %v576 = vpop.f32.mrb[0].mxu0
        %v577 = vpop.f32.mrb[0].mxu0
        %v578 = vadd.f32 %v373, %v577
        %v579 = vpop.f32.mrb[0].mxu0
        %580 = vmatprep.mubr.bf16.mxu0 0
        %581 = vmatmul.mubr.bf16.gmra.mrb[0].mxu0 %v442
        %v582 = vpop.f32.mrb[0].mxu0
        %v583 = vadd.f32 %v373, %v582
        %v584 = vpop.f32.mrb[0].mxu0
        %v585 = vpop.f32.mrb[0].mxu0
        %v586 = vadd.f32 %v373, %v585
        %v587 = vpop.f32.mrb[0].mxu0
        %588 = vmatprep.mubr.bf16.mxu0 0
        %589 = vmatmul.mubr.bf16.gmra.mrb[0].mxu0 %v445
        %v590 = vpop.f32.mrb[0].mxu0
        %v591 = vadd.f32 %v373, %v590
        %v592 = vpop.f32.mrb[0].mxu0
        %v593 = vpop.f32.mrb[0].mxu0
        %v594 = vadd.f32 %v373, %v593
        %v595 = vpop.f32.mrb[0].mxu0
        %596 = vmatprep.mubr.bf16.mxu0 0
        %597 = vmatmul.mubr.bf16.gmra.mrb[0].mxu0 %v448
        %v598 = vpop.f32.mrb[0].mxu0
        %v599 = vadd.f32 %v373, %v598
        %v600 = vpop.f32.mrb[0].mxu0
        %v601 = vpop.f32.mrb[0].mxu0
        %v602 = vadd.f32 %v373, %v601
        %v603 = vpop.f32.mrb[0].mxu0
        %604 = vmatprep.mubr.bf16.mxu0 0
        %605 = vmatmul.mubr.bf16.gmra.mrb[0].mxu0 %v451
        %v606 = vpop.f32.mrb[0].mxu0
        %v607 = vadd.f32 %v373, %v606
        %v608 = vpop.f32.mrb[0].mxu0
        %v609 = vpop.f32.mrb[0].mxu0
        %v610 = vadd.f32 %v373, %v609
        %v611 = vpop.f32.mrb[0].mxu0
        %612 = vmatprep.mubr.bf16.mxu0 0
        %613 = vmatmul.mubr.bf16.gmra.mrb[0].mxu0 %v454
        %v614 = vpop.f32.mrb[0].mxu0
        %v615 = vadd.f32 %v373, %v614
        %v616 = vpop.f32.mrb[0].mxu0
        %v617 = vpop.f32.mrb[0].mxu0
        %v618 = vadd.f32 %v373, %v617
        %v619 = vpop.f32.mrb[0].mxu0
        %620 = vdwg.mxu0
        %v621 = vmax.f32 %v495, 0.0
        %v622 = vmax.f32 %v498, 0.0
        %v623 = vmax.f32 %v503, 0.0
        %v624 = vmax.f32 %v506, 0.0
        %v625 = vmax.f32 %v511, 0.0
        %v626 = vmax.f32 %v514, 0.0
        %v627 = vmax.f32 %v519, 0.0
        %v628 = vmax.f32 %v522, 0.0
        %v629 = vmax.f32 %v527, 0.0
        %v630 = vmax.f32 %v530, 0.0
        %v631 = vmax.f32 %v535, 0.0
        %v632 = vmax.f32 %v538, 0.0
        %v633 = vmax.f32 %v543, 0.0
        %v634 = vmax.f32 %v546, 0.0
        %v635 = vmax.f32 %v551, 0.0
        %v636 = vmax.f32 %v554, 0.0
        %v637 = vmax.f32 %v559, 0.0
        %v638 = vmax.f32 %v562, 0.0
        %v639 = vmax.f32 %v567, 0.0
        %v640 = vmax.f32 %v570, 0.0
        %v641 = vmax.f32 %v575, 0.0
        %v642 = vmax.f32 %v578, 0.0
        %v643 = vmax.f32 %v583, 0.0
        %v644 = vmax.f32 %v586, 0.0
        %v645 = vmax.f32 %v591, 0.0
        %v646 = vmax.f32 %v594, 0.0
        %v647 = vmax.f32 %v599, 0.0
        %v648 = vmax.f32 %v602, 0.0
        %v649 = vmax.f32 %v607, 0.0
        %v650 = vmax.f32 %v610, 0.0
        %v651 = vmax.f32 %v615, 0.0
        %v652 = vmax.f32 %v618, 0.0
        %653 = vst [vmem:[%s328 + $0x1] sm:$0xff] %v621
        %654 = vst [vmem:[%s328 + $0x9] sm:$0xff] %v622
        %655 = vst [vmem:[%s328 + $0x19] sm:$0xff] %v623
        %656 = vst [vmem:[%s328 + $0x21] sm:$0xff] %v624
        %657 = vst [vmem:[%s328 + $0x31] sm:$0xff] %v625
        %658 = vst [vmem:[%s328 + $0x39] sm:$0xff] %v626
        %659 = vst [vmem:[%s328 + $0x49] sm:$0xff] %v627
        %660 = vst [vmem:[%s328 + $0x51] sm:$0xff] %v628
        %661 = vst [vmem:[%s328 + $0x61] sm:$0xff] %v629
        %662 = vst [vmem:[%s328 + $0x69] sm:$0xff] %v630
        %663 = vst [vmem:[%s328 + $0x79] sm:$0xff] %v631
        %664 = vst [vmem:[%s328 + $0x81] sm:$0xff] %v632
        %665 = vst [vmem:[%s328 + $0x91] sm:$0xff] %v633
        %666 = vst [vmem:[%s328 + $0x99] sm:$0xff] %v634
        %667 = vst [vmem:[%s328 + $0xa9] sm:$0xff] %v635
        %668 = vst [vmem:[%s328 + $0xb1] sm:$0xff] %v636
        %669 = vst [vmem:[%s328 + $0xc1] sm:$0xff] %v637
        %670 = vst [vmem:[%s328 + $0xc9] sm:$0xff] %v638
        %671 = vst [vmem:[%s328 + $0xd9] sm:$0xff] %v639
        %672 = vst [vmem:[%s328 + $0xe1] sm:$0xff] %v640
        %673 = vst [vmem:[%s328 + $0xf1] sm:$0xff] %v641
        %674 = vst [vmem:[%s328 + $0xf9] sm:$0xff] %v642
        %675 = vst [vmem:[%s328 + $0x109] sm:$0xff] %v643
        %676 = vst [vmem:[%s328 + $0x111] sm:$0xff] %v644
        %677 = vst [vmem:[%s328 + $0x121] sm:$0xff] %v645
        %678 = vst [vmem:[%s328 + $0x129] sm:$0xff] %v646
        %679 = vst [vmem:[%s328 + $0x139] sm:$0xff] %v647
        %680 = vst [vmem:[%s328 + $0x141] sm:$0xff] %v648
        %681 = vst [vmem:[%s328 + $0x151] sm:$0xff] %v649
        %682 = vst [vmem:[%s328 + $0x159] sm:$0xff] %v650
        %683 = vst [vmem:[%s328 + $0x169] sm:$0xff] %v651
        %684 = vst [vmem:[%s328 + $0x171] sm:$0xff] %v652
        %v685 = vld [vmem:[%s3] sm:$0x1]
        %v686 = vld [vmem:[#allocation2] sm:$0xff]
        %v687 = vld [vmem:[#allocation2 + $0x8] sm:$0xff]
        %v688 = vld [vmem:[#allocation2 + $0x18] sm:$0xff]
        %v689 = vld [vmem:[#allocation2 + $0x20] sm:$0xff]
        %v690 = vld [vmem:[#allocation2 + $0x30] sm:$0xff]
        %v691 = vld [vmem:[#allocation2 + $0x38] sm:$0xff]
        %v692 = vld [vmem:[#allocation2 + $0x48] sm:$0xff]
        %v693 = vld [vmem:[#allocation2 + $0x50] sm:$0xff]
        %v694 = vld [vmem:[#allocation2 + $0x60] sm:$0xff]
        %v695 = vld [vmem:[#allocation2 + $0x68] sm:$0xff]
        %v696 = vld [vmem:[#allocation2 + $0x78] sm:$0xff]
        %v697 = vld [vmem:[#allocation2 + $0x80] sm:$0xff]
        %v698 = vld [vmem:[#allocation2 + $0x90] sm:$0xff]
        %v699 = vld [vmem:[#allocation2 + $0x98] sm:$0xff]
        %v700 = vld [vmem:[#allocation2 + $0xa8] sm:$0xff]
        %v701 = vld [vmem:[#allocation2 + $0xb0] sm:$0xff]
        %v702 = vlaneseq
        %v703 = vshrl.u32 %v702, 7
        %v704 = vsub.s32 0, %v703
        %v705 = vrot.slane %v685, %v704
        %v706 = vmul.f32 %v686, %v705
        %v707 = vmul.f32 %v687, %v705
        %v708 = vmul.f32 %v688, %v705
        %v709 = vmul.f32 %v689, %v705
        %v710 = vmul.f32 %v690, %v705
        %v711 = vmul.f32 %v691, %v705
        %v712 = vmul.f32 %v692, %v705
        %v713 = vmul.f32 %v693, %v705
        %v714 = vmul.f32 %v694, %v705
        %v715 = vmul.f32 %v695, %v705
        %v716 = vmul.f32 %v696, %v705
        %v717 = vmul.f32 %v697, %v705
        %v718 = vmul.f32 %v698, %v705
        %v719 = vmul.f32 %v699, %v705
        %v720 = vmul.f32 %v700, %v705
        %v721 = vmul.f32 %v701, %v705
        %v722 = vadd.f32 %v706, 0.0
        %v723 = vadd.f32 %v707, 0.0
        %v724 = vadd.f32 %v708, 0.0
        %v725 = vadd.f32 %v709, 0.0
        %v726 = vadd.f32 %v710, 0.0
        %v727 = vadd.f32 %v711, 0.0
        %v728 = vadd.f32 %v712, 0.0
        %v729 = vadd.f32 %v713, 0.0
        %v730 = vadd.f32 %v714, 0.0
        %v731 = vadd.f32 %v715, 0.0
        %v732 = vadd.f32 %v716, 0.0
        %v733 = vadd.f32 %v717, 0.0
        %v734 = vadd.f32 %v718, 0.0
        %v735 = vadd.f32 %v719, 0.0
        %v736 = vadd.f32 %v720, 0.0
        %v737 = vadd.f32 %v721, 0.0
        %v738 = vld [vmem:[%s3 + $0x1] sm:$0x1]
        %v739 = vld [vmem:[#allocation2 + $0x1] sm:$0xff]
        %v740 = vld [vmem:[#allocation2 + $0x9] sm:$0xff]
        %v741 = vld [vmem:[#allocation2 + $0x19] sm:$0xff]
        %v742 = vld [vmem:[#allocation2 + $0x21] sm:$0xff]
        %v743 = vld [vmem:[#allocation2 + $0x31] sm:$0xff]
        %v744 = vld [vmem:[#allocation2 + $0x39] sm:$0xff]
        %v745 = vld [vmem:[#allocation2 + $0x49] sm:$0xff]
        %v746 = vld [vmem:[#allocation2 + $0x51] sm:$0xff]
        %v747 = vld [vmem:[#allocation2 + $0x61] sm:$0xff]
        %v748 = vld [vmem:[#allocation2 + $0x69] sm:$0xff]
        %v749 = vld [vmem:[#allocation2 + $0x79] sm:$0xff]
        %v750 = vld [vmem:[#allocation2 + $0x81] sm:$0xff]
        %v751 = vld [vmem:[#allocation2 + $0x91] sm:$0xff]
        %v752 = vld [vmem:[#allocation2 + $0x99] sm:$0xff]
        %v753 = vld [vmem:[#allocation2 + $0xa9] sm:$0xff]
        %v754 = vld [vmem:[#allocation2 + $0xb1] sm:$0xff]
        %v755 = vlaneseq
        %v756 = vshrl.u32 %v755, 7
        %v757 = vsub.s32 0, %v756
        %v758 = vrot.slane %v738, %v757
        %v759 = vmul.f32 %v739, %v758
        %v760 = vmul.f32 %v740, %v758
        %v761 = vmul.f32 %v741, %v758
        %v762 = vmul.f32 %v742, %v758
        %v763 = vmul.f32 %v743, %v758
        %v764 = vmul.f32 %v744, %v758
        %v765 = vmul.f32 %v745, %v758
        %v766 = vmul.f32 %v746, %v758
        %v767 = vmul.f32 %v747, %v758
        %v768 = vmul.f32 %v748, %v758
        %v769 = vmul.f32 %v749, %v758
        %v770 = vmul.f32 %v750, %v758
        %v771 = vmul.f32 %v751, %v758
        %v772 = vmul.f32 %v752, %v758
        %v773 = vmul.f32 %v753, %v758
        %v774 = vmul.f32 %v754, %v758
        %v775 = vadd.f32 %v722, %v759
        %v776 = vadd.f32 %v723, %v760
        %v777 = vadd.f32 %v724, %v761
        %v778 = vadd.f32 %v725, %v762
        %v779 = vadd.f32 %v726, %v763
        %v780 = vadd.f32 %v727, %v764
        %v781 = vadd.f32 %v728, %v765
        %v782 = vadd.f32 %v729, %v766
        %v783 = vadd.f32 %v730, %v767
        %v784 = vadd.f32 %v731, %v768
        %v785 = vadd.f32 %v732, %v769
        %v786 = vadd.f32 %v733, %v770
        %v787 = vadd.f32 %v734, %v771
        %v788 = vadd.f32 %v735, %v772
        %v789 = vadd.f32 %v736, %v773
        %v790 = vadd.f32 %v737, %v774
        %v791 = vld [vmem:[%s3 + $0x2] sm:$0x1]
        %v792 = vld [vmem:[#allocation2 + $0x2] sm:$0xff]
        %v793 = vld [vmem:[#allocation2 + $0xa] sm:$0xff]
        %v794 = vld [vmem:[#allocation2 + $0x1a] sm:$0xff]
        %v795 = vld [vmem:[#allocation2 + $0x22] sm:$0xff]
        %v796 = vld [vmem:[#allocation2 + $0x32] sm:$0xff]
        %v797 = vld [vmem:[#allocation2 + $0x3a] sm:$0xff]
        %v798 = vld [vmem:[#allocation2 + $0x4a] sm:$0xff]
        %v799 = vld [vmem:[#allocation2 + $0x52] sm:$0xff]
        %v800 = vld [vmem:[#allocation2 + $0x62] sm:$0xff]
        %v801 = vld [vmem:[#allocation2 + $0x6a] sm:$0xff]
        %v802 = vld [vmem:[#allocation2 + $0x7a] sm:$0xff]
        %v803 = vld [vmem:[#allocation2 + $0x82] sm:$0xff]
        %v804 = vld [vmem:[#allocation2 + $0x92] sm:$0xff]
        %v805 = vld [vmem:[#allocation2 + $0x9a] sm:$0xff]
        %v806 = vld [vmem:[#allocation2 + $0xaa] sm:$0xff]
        %v807 = vld [vmem:[#allocation2 + $0xb2] sm:$0xff]
        %v808 = vlaneseq
        %v809 = vshrl.u32 %v808, 7
        %v810 = vsub.s32 0, %v809
        %v811 = vrot.slane %v791, %v810
        %v812 = vmul.f32 %v792, %v811
        %v813 = vmul.f32 %v793, %v811
        %v814 = vmul.f32 %v794, %v811
        %v815 = vmul.f32 %v795, %v811
        %v816 = vmul.f32 %v796, %v811
        %v817 = vmul.f32 %v797, %v811
        %v818 = vmul.f32 %v798, %v811
        %v819 = vmul.f32 %v799, %v811
        %v820 = vmul.f32 %v800, %v811
        %v821 = vmul.f32 %v801, %v811
        %v822 = vmul.f32 %v802, %v811
        %v823 = vmul.f32 %v803, %v811
        %v824 = vmul.f32 %v804, %v811
        %v825 = vmul.f32 %v805, %v811
        %v826 = vmul.f32 %v806, %v811
        %v827 = vmul.f32 %v807, %v811
        %v828 = vadd.f32 %v775, %v812
        %v829 = vadd.f32 %v776, %v813
        %v830 = vadd.f32 %v777, %v814
        %v831 = vadd.f32 %v778, %v815
        %v832 = vadd.f32 %v779, %v816
        %v833 = vadd.f32 %v780, %v817
        %v834 = vadd.f32 %v781, %v818
        %v835 = vadd.f32 %v782, %v819
        %v836 = vadd.f32 %v783, %v820
        %v837 = vadd.f32 %v784, %v821
        %v838 = vadd.f32 %v785, %v822
        %v839 = vadd.f32 %v786, %v823
        %v840 = vadd.f32 %v787, %v824
        %v841 = vadd.f32 %v788, %v825
        %v842 = vadd.f32 %v789, %v826
        %v843 = vadd.f32 %v790, %v827
        %v844 = vld [vmem:[%s3 + $0x3] sm:$0x1]
        %v845 = vld [vmem:[%s328] sm:$0xff]
        %v846 = vld [vmem:[%s328 + $0x8] sm:$0xff]
        %v847 = vld [vmem:[%s328 + $0x18] sm:$0xff]
        %v848 = vld [vmem:[%s328 + $0x20] sm:$0xff]
        %v849 = vld [vmem:[%s328 + $0x30] sm:$0xff]
        %v850 = vld [vmem:[%s328 + $0x38] sm:$0xff]
        %v851 = vld [vmem:[%s328 + $0x48] sm:$0xff]
        %v852 = vld [vmem:[%s328 + $0x50] sm:$0xff]
        %v853 = vld [vmem:[%s328 + $0x60] sm:$0xff]
        %v854 = vld [vmem:[%s328 + $0x68] sm:$0xff]
        %v855 = vld [vmem:[%s328 + $0x78] sm:$0xff]
        %v856 = vld [vmem:[%s328 + $0x80] sm:$0xff]
        %v857 = vld [vmem:[%s328 + $0x90] sm:$0xff]
        %v858 = vld [vmem:[%s328 + $0x98] sm:$0xff]
        %v859 = vld [vmem:[%s328 + $0xa8] sm:$0xff]
        %v860 = vld [vmem:[%s328 + $0xb0] sm:$0xff]
        %v861 = vlaneseq
        %v862 = vshrl.u32 %v861, 7
        %v863 = vsub.s32 0, %v862
        %v864 = vrot.slane %v844, %v863
        %v865 = vmul.f32 %v845, %v864
        %v866 = vmul.f32 %v846, %v864
        %v867 = vmul.f32 %v847, %v864
        %v868 = vmul.f32 %v848, %v864
        %v869 = vmul.f32 %v849, %v864
        %v870 = vmul.f32 %v850, %v864
        %v871 = vmul.f32 %v851, %v864
        %v872 = vmul.f32 %v852, %v864
        %v873 = vmul.f32 %v853, %v864
        %v874 = vmul.f32 %v854, %v864
        %v875 = vmul.f32 %v855, %v864
        %v876 = vmul.f32 %v856, %v864
        %v877 = vmul.f32 %v857, %v864
        %v878 = vmul.f32 %v858, %v864
        %v879 = vmul.f32 %v859, %v864
        %v880 = vmul.f32 %v860, %v864
        %v881 = vadd.f32 %v828, %v865
        %v882 = vadd.f32 %v829, %v866
        %v883 = vadd.f32 %v830, %v867
        %v884 = vadd.f32 %v831, %v868
        %v885 = vadd.f32 %v832, %v869
        %v886 = vadd.f32 %v833, %v870
        %v887 = vadd.f32 %v834, %v871
        %v888 = vadd.f32 %v835, %v872
        %v889 = vadd.f32 %v836, %v873
        %v890 = vadd.f32 %v837, %v874
        %v891 = vadd.f32 %v838, %v875
        %v892 = vadd.f32 %v839, %v876
        %v893 = vadd.f32 %v840, %v877
        %v894 = vadd.f32 %v841, %v878
        %v895 = vadd.f32 %v842, %v879
        %v896 = vadd.f32 %v843, %v880
        %v897 = vld [vmem:[%s3 + $0x4] sm:$0x1]
        %v898 = vld [vmem:[%s328 + $0x1] sm:$0xff]
        %v899 = vld [vmem:[%s328 + $0x9] sm:$0xff]
        %v900 = vld [vmem:[%s328 + $0x19] sm:$0xff]
        %v901 = vld [vmem:[%s328 + $0x21] sm:$0xff]
        %v902 = vld [vmem:[%s328 + $0x31] sm:$0xff]
        %v903 = vld [vmem:[%s328 + $0x39] sm:$0xff]
        %v904 = vld [vmem:[%s328 + $0x49] sm:$0xff]
        %v905 = vld [vmem:[%s328 + $0x51] sm:$0xff]
        %v906 = vld [vmem:[%s328 + $0x61] sm:$0xff]
        %v907 = vld [vmem:[%s328 + $0x69] sm:$0xff]
        %v908 = vld [vmem:[%s328 + $0x79] sm:$0xff]
        %v909 = vld [vmem:[%s328 + $0x81] sm:$0xff]
        %v910 = vld [vmem:[%s328 + $0x91] sm:$0xff]
        %v911 = vld [vmem:[%s328 + $0x99] sm:$0xff]
        %v912 = vld [vmem:[%s328 + $0xa9] sm:$0xff]
        %v913 = vld [vmem:[%s328 + $0xb1] sm:$0xff]
        %v914 = vlaneseq
        %v915 = vshrl.u32 %v914, 7
        %v916 = vsub.s32 0, %v915
        %v917 = vrot.slane %v897, %v916
        %v918 = vmul.f32 %v898, %v917
        %v919 = vmul.f32 %v899, %v917
        %v920 = vmul.f32 %v900, %v917
        %v921 = vmul.f32 %v901, %v917
        %v922 = vmul.f32 %v902, %v917
        %v923 = vmul.f32 %v903, %v917
        %v924 = vmul.f32 %v904, %v917
        %v925 = vmul.f32 %v905, %v917
        %v926 = vmul.f32 %v906, %v917
        %v927 = vmul.f32 %v907, %v917
        %v928 = vmul.f32 %v908, %v917
        %v929 = vmul.f32 %v909, %v917
        %v930 = vmul.f32 %v910, %v917
        %v931 = vmul.f32 %v911, %v917
        %v932 = vmul.f32 %v912, %v917
        %v933 = vmul.f32 %v913, %v917
        %v934 = vadd.f32 %v881, %v918
        %v935 = vadd.f32 %v882, %v919
        %v936 = vadd.f32 %v883, %v920
        %v937 = vadd.f32 %v884, %v921
        %v938 = vadd.f32 %v885, %v922
        %v939 = vadd.f32 %v886, %v923
        %v940 = vadd.f32 %v887, %v924
        %v941 = vadd.f32 %v888, %v925
        %v942 = vadd.f32 %v889, %v926
        %v943 = vadd.f32 %v890, %v927
        %v944 = vadd.f32 %v891, %v928
        %v945 = vadd.f32 %v892, %v929
        %v946 = vadd.f32 %v893, %v930
        %v947 = vadd.f32 %v894, %v931
        %v948 = vadd.f32 %v895, %v932
        %v949 = vadd.f32 %v896, %v933
        %v950 = vld [vmem:[%s3 + $0x5] sm:$0x1]
        %v951 = vld [vmem:[%s328 + $0x2] sm:$0xff]
        %v952 = vld [vmem:[%s328 + $0xa] sm:$0xff]
        %v953 = vld [vmem:[%s328 + $0x1a] sm:$0xff]
        %v954 = vld [vmem:[%s328 + $0x22] sm:$0xff]
        %v955 = vld [vmem:[%s328 + $0x32] sm:$0xff]
        %v956 = vld [vmem:[%s328 + $0x3a] sm:$0xff]
        %v957 = vld [vmem:[%s328 + $0x4a] sm:$0xff]
        %v958 = vld [vmem:[%s328 + $0x52] sm:$0xff]
        %v959 = vld [vmem:[%s328 + $0x62] sm:$0xff]
        %v960 = vld [vmem:[%s328 + $0x6a] sm:$0xff]
        %v961 = vld [vmem:[%s328 + $0x7a] sm:$0xff]
        %v962 = vld [vmem:[%s328 + $0x82] sm:$0xff]
        %v963 = vld [vmem:[%s328 + $0x92] sm:$0xff]
        %v964 = vld [vmem:[%s328 + $0x9a] sm:$0xff]
        %v965 = vld [vmem:[%s328 + $0xaa] sm:$0xff]
        %v966 = vld [vmem:[%s328 + $0xb2] sm:$0xff]
        %v967 = vlaneseq
        %v968 = vshrl.u32 %v967, 7
        %v969 = vsub.s32 0, %v968
        %v970 = vrot.slane %v950, %v969
        %v971 = vmul.f32 %v951, %v970
        %v972 = vmul.f32 %v952, %v970
        %v973 = vmul.f32 %v953, %v970
        %v974 = vmul.f32 %v954, %v970
        %v975 = vmul.f32 %v955, %v970
        %v976 = vmul.f32 %v956, %v970
        %v977 = vmul.f32 %v957, %v970
        %v978 = vmul.f32 %v958, %v970
        %v979 = vmul.f32 %v959, %v970
        %v980 = vmul.f32 %v960, %v970
        %v981 = vmul.f32 %v961, %v970
        %v982 = vmul.f32 %v962, %v970
        %v983 = vmul.f32 %v963, %v970
        %v984 = vmul.f32 %v964, %v970
        %v985 = vmul.f32 %v965, %v970
        %v986 = vmul.f32 %v966, %v970
        %v987 = vadd.f32 %v934, %v971
        %v988 = vadd.f32 %v935, %v972
        %v989 = vadd.f32 %v936, %v973
        %v990 = vadd.f32 %v937, %v974
        %v991 = vadd.f32 %v938, %v975
        %v992 = vadd.f32 %v939, %v976
        %v993 = vadd.f32 %v940, %v977
        %v994 = vadd.f32 %v941, %v978
        %v995 = vadd.f32 %v942, %v979
        %v996 = vadd.f32 %v943, %v980
        %v997 = vadd.f32 %v944, %v981
        %v998 = vadd.f32 %v945, %v982
        %v999 = vadd.f32 %v946, %v983
        %v1000 = vadd.f32 %v947, %v984
        %v1001 = vadd.f32 %v948, %v985
        %v1002 = vadd.f32 %v949, %v986
        %v1003 = vld [vmem:[%s3 + $0x6] sm:$0x1]
        %s1004 = scalar_lea.vmem [#allocation2], 48
        %v1005 = vld [vmem:[%s1004] sm:$0xff]
        %v1006 = vld [vmem:[%s1004 + $0x8] sm:$0xff]
        %v1007 = vld [vmem:[%s1004 + $0x18] sm:$0xff]
        %v1008 = vld [vmem:[%s1004 + $0x20] sm:$0xff]
        %v1009 = vld [vmem:[%s1004 + $0x30] sm:$0xff]
        %v1010 = vld [vmem:[%s1004 + $0x38] sm:$0xff]
        %v1011 = vld [vmem:[%s1004 + $0x48] sm:$0xff]
        %v1012 = vld [vmem:[%s1004 + $0x50] sm:$0xff]
        %v1013 = vld [vmem:[%s1004 + $0x60] sm:$0xff]
        %v1014 = vld [vmem:[%s1004 + $0x68] sm:$0xff]
        %v1015 = vld [vmem:[%s1004 + $0x78] sm:$0xff]
        %v1016 = vld [vmem:[%s1004 + $0x80] sm:$0xff]
        %v1017 = vld [vmem:[%s1004 + $0x90] sm:$0xff]
        %v1018 = vld [vmem:[%s1004 + $0x98] sm:$0xff]
        %v1019 = vld [vmem:[%s1004 + $0xa8] sm:$0xff]
        %v1020 = vld [vmem:[%s1004 + $0xb0] sm:$0xff]
        %v1021 = vlaneseq
        %v1022 = vshrl.u32 %v1021, 7
        %v1023 = vsub.s32 0, %v1022
        %v1024 = vrot.slane %v1003, %v1023
        %v1025 = vmul.f32 %v1005, %v1024
        %v1026 = vmul.f32 %v1006, %v1024
        %v1027 = vmul.f32 %v1007, %v1024
        %v1028 = vmul.f32 %v1008, %v1024
        %v1029 = vmul.f32 %v1009, %v1024
        %v1030 = vmul.f32 %v1010, %v1024
        %v1031 = vmul.f32 %v1011, %v1024
        %v1032 = vmul.f32 %v1012, %v1024
        %v1033 = vmul.f32 %v1013, %v1024
        %v1034 = vmul.f32 %v1014, %v1024
        %v1035 = vmul.f32 %v1015, %v1024
        %v1036 = vmul.f32 %v1016, %v1024
        %v1037 = vmul.f32 %v1017, %v1024
        %v1038 = vmul.f32 %v1018, %v1024
        %v1039 = vmul.f32 %v1019, %v1024
        %v1040 = vmul.f32 %v1020, %v1024
        %v1041 = vadd.f32 %v987, %v1025
        %v1042 = vadd.f32 %v988, %v1026
        %v1043 = vadd.f32 %v989, %v1027
        %v1044 = vadd.f32 %v990, %v1028
        %v1045 = vadd.f32 %v991, %v1029
        %v1046 = vadd.f32 %v992, %v1030
        %v1047 = vadd.f32 %v993, %v1031
        %v1048 = vadd.f32 %v994, %v1032
        %v1049 = vadd.f32 %v995, %v1033
        %v1050 = vadd.f32 %v996, %v1034
        %v1051 = vadd.f32 %v997, %v1035
        %v1052 = vadd.f32 %v998, %v1036
        %v1053 = vadd.f32 %v999, %v1037
        %v1054 = vadd.f32 %v1000, %v1038
        %v1055 = vadd.f32 %v1001, %v1039
        %v1056 = vadd.f32 %v1002, %v1040
        %v1057 = vld [vmem:[%s3 + $0x7] sm:$0x1]
        %v1058 = vld [vmem:[%s1004 + $0x1] sm:$0xff]
        %v1059 = vld [vmem:[%s1004 + $0x9] sm:$0xff]
        %v1060 = vld [vmem:[%s1004 + $0x19] sm:$0xff]
        %v1061 = vld [vmem:[%s1004 + $0x21] sm:$0xff]
        %v1062 = vld [vmem:[%s1004 + $0x31] sm:$0xff]
        %v1063 = vld [vmem:[%s1004 + $0x39] sm:$0xff]
        %v1064 = vld [vmem:[%s1004 + $0x49] sm:$0xff]
        %v1065 = vld [vmem:[%s1004 + $0x51] sm:$0xff]
        %v1066 = vld [vmem:[%s1004 + $0x61] sm:$0xff]
        %v1067 = vld [vmem:[%s1004 + $0x69] sm:$0xff]
        %v1068 = vld [vmem:[%s1004 + $0x79] sm:$0xff]
        %v1069 = vld [vmem:[%s1004 + $0x81] sm:$0xff]
        %v1070 = vld [vmem:[%s1004 + $0x91] sm:$0xff]
        %v1071 = vld [vmem:[%s1004 + $0x99] sm:$0xff]
        %v1072 = vld [vmem:[%s1004 + $0xa9] sm:$0xff]
        %v1073 = vld [vmem:[%s1004 + $0xb1] sm:$0xff]
        %v1074 = vlaneseq
        %v1075 = vshrl.u32 %v1074, 7
        %v1076 = vsub.s32 0, %v1075
        %v1077 = vrot.slane %v1057, %v1076
        %v1078 = vmul.f32 %v1058, %v1077
        %v1079 = vmul.f32 %v1059, %v1077
        %v1080 = vmul.f32 %v1060, %v1077
        %v1081 = vmul.f32 %v1061, %v1077
        %v1082 = vmul.f32 %v1062, %v1077
        %v1083 = vmul.f32 %v1063, %v1077
        %v1084 = vmul.f32 %v1064, %v1077
        %v1085 = vmul.f32 %v1065, %v1077
        %v1086 = vmul.f32 %v1066, %v1077
        %v1087 = vmul.f32 %v1067, %v1077
        %v1088 = vmul.f32 %v1068, %v1077
        %v1089 = vmul.f32 %v1069, %v1077
        %v1090 = vmul.f32 %v1070, %v1077
        %v1091 = vmul.f32 %v1071, %v1077
        %v1092 = vmul.f32 %v1072, %v1077
        %v1093 = vmul.f32 %v1073, %v1077
        %v1094 = vadd.f32 %v1041, %v1078
        %v1095 = vadd.f32 %v1042, %v1079
        %v1096 = vadd.f32 %v1043, %v1080
        %v1097 = vadd.f32 %v1044, %v1081
        %v1098 = vadd.f32 %v1045, %v1082
        %v1099 = vadd.f32 %v1046, %v1083
        %v1100 = vadd.f32 %v1047, %v1084
        %v1101 = vadd.f32 %v1048, %v1085
        %v1102 = vadd.f32 %v1049, %v1086
        %v1103 = vadd.f32 %v1050, %v1087
        %v1104 = vadd.f32 %v1051, %v1088
        %v1105 = vadd.f32 %v1052, %v1089
        %v1106 = vadd.f32 %v1053, %v1090
        %v1107 = vadd.f32 %v1054, %v1091
        %v1108 = vadd.f32 %v1055, %v1092
        %v1109 = vadd.f32 %v1056, %v1093
        %v1110 = vld [vmem:[%s3 + $0x8] sm:$0x1]
        %v1111 = vld [vmem:[%s1004 + $0x2] sm:$0xff]
        %v1112 = vld [vmem:[%s1004 + $0xa] sm:$0xff]
        %v1113 = vld [vmem:[%s1004 + $0x1a] sm:$0xff]
        %v1114 = vld [vmem:[%s1004 + $0x22] sm:$0xff]
        %v1115 = vld [vmem:[%s1004 + $0x32] sm:$0xff]
        %v1116 = vld [vmem:[%s1004 + $0x3a] sm:$0xff]
        %v1117 = vld [vmem:[%s1004 + $0x4a] sm:$0xff]
        %v1118 = vld [vmem:[%s1004 + $0x52] sm:$0xff]
        %v1119 = vld [vmem:[%s1004 + $0x62] sm:$0xff]
        %v1120 = vld [vmem:[%s1004 + $0x6a] sm:$0xff]
        %v1121 = vld [vmem:[%s1004 + $0x7a] sm:$0xff]
        %v1122 = vld [vmem:[%s1004 + $0x82] sm:$0xff]
        %v1123 = vld [vmem:[%s1004 + $0x92] sm:$0xff]
        %v1124 = vld [vmem:[%s1004 + $0x9a] sm:$0xff]
        %v1125 = vld [vmem:[%s1004 + $0xaa] sm:$0xff]
        %v1126 = vld [vmem:[%s1004 + $0xb2] sm:$0xff]
        %v1127 = vlaneseq
        %v1128 = vshrl.u32 %v1127, 7
        %v1129 = vsub.s32 0, %v1128
        %v1130 = vrot.slane %v1110, %v1129
        %v1131 = vmul.f32 %v1111, %v1130
        %v1132 = vmul.f32 %v1112, %v1130
        %v1133 = vmul.f32 %v1113, %v1130
        %v1134 = vmul.f32 %v1114, %v1130
        %v1135 = vmul.f32 %v1115, %v1130
        %v1136 = vmul.f32 %v1116, %v1130
        %v1137 = vmul.f32 %v1117, %v1130
        %v1138 = vmul.f32 %v1118, %v1130
        %v1139 = vmul.f32 %v1119, %v1130
        %v1140 = vmul.f32 %v1120, %v1130
        %v1141 = vmul.f32 %v1121, %v1130
        %v1142 = vmul.f32 %v1122, %v1130
        %v1143 = vmul.f32 %v1123, %v1130
        %v1144 = vmul.f32 %v1124, %v1130
        %v1145 = vmul.f32 %v1125, %v1130
        %v1146 = vmul.f32 %v1126, %v1130
        %v1147 = vadd.f32 %v1094, %v1131
        %v1148 = vadd.f32 %v1095, %v1132
        %v1149 = vadd.f32 %v1096, %v1133
        %v1150 = vadd.f32 %v1097, %v1134
        %v1151 = vadd.f32 %v1098, %v1135
        %v1152 = vadd.f32 %v1099, %v1136
        %v1153 = vadd.f32 %v1100, %v1137
        %v1154 = vadd.f32 %v1101, %v1138
        %v1155 = vadd.f32 %v1102, %v1139
        %v1156 = vadd.f32 %v1103, %v1140
        %v1157 = vadd.f32 %v1104, %v1141
        %v1158 = vadd.f32 %v1105, %v1142
        %v1159 = vadd.f32 %v1106, %v1143
        %v1160 = vadd.f32 %v1107, %v1144
        %v1161 = vadd.f32 %v1108, %v1145
        %v1162 = vadd.f32 %v1109, %v1146
        %v1163 = vld [vmem:[%s4] sm:$0x1]
        %v1165 = vlaneseq
        %v1166 = vshrl.u32 %v1165, 7
        %v1167 = vsub.s32 0, %v1166
        %v1168 = vrot.slane %v1163, %v1167
        %v1170 = vadd.f32 %v1147, %v1168
        %v1171 = vadd.f32 %v1148, %v1168
        %v1172 = vadd.f32 %v1149, %v1168
        %v1173 = vadd.f32 %v1150, %v1168
        %v1174 = vadd.f32 %v1151, %v1168
        %v1175 = vadd.f32 %v1152, %v1168
        %v1176 = vadd.f32 %v1153, %v1168
        %v1177 = vadd.f32 %v1154, %v1168
        %v1178 = vadd.f32 %v1155, %v1168
        %v1179 = vadd.f32 %v1156, %v1168
        %v1180 = vadd.f32 %v1157, %v1168
        %v1181 = vadd.f32 %v1158, %v1168
        %v1182 = vadd.f32 %v1159, %v1168
        %v1183 = vadd.f32 %v1160, %v1168
        %v1184 = vadd.f32 %v1161, %v1168
        %v1185 = vadd.f32 %v1162, %v1168
        %v1186 = vmax.f32 %v1170, 0.0
        %v1187 = vmax.f32 %v1171, 0.0
        %v1188 = vmax.f32 %v1172, 0.0
        %v1189 = vmax.f32 %v1173, 0.0
        %v1190 = vmax.f32 %v1174, 0.0
        %v1191 = vmax.f32 %v1175, 0.0
        %v1192 = vmax.f32 %v1176, 0.0
        %v1193 = vmax.f32 %v1177, 0.0
        %v1194 = vmax.f32 %v1178, 0.0
        %v1195 = vmax.f32 %v1179, 0.0
        %v1196 = vmax.f32 %v1180, 0.0
        %v1197 = vmax.f32 %v1181, 0.0
        %v1198 = vmax.f32 %v1182, 0.0
        %v1199 = vmax.f32 %v1183, 0.0
        %v1200 = vmax.f32 %v1184, 0.0
        %v1201 = vmax.f32 %v1185, 0.0
        %v1202 = vpack.c.bf16 %v1187, %v1186
        %v1203 = vpack.c.bf16 %v1189, %v1188
        %v1204 = vpack.c.bf16 %v1191, %v1190
        %v1205 = vpack.c.bf16 %v1193, %v1192
        %v1206 = vpack.c.bf16 %v1195, %v1194
        %v1207 = vpack.c.bf16 %v1197, %v1196
        %v1208 = vpack.c.bf16 %v1199, %v1198
        %v1209 = vpack.c.bf16 %v1201, %v1200
        %v1210 = vld [vmem:[%s5] sm:$0x3]
        %v1211 = vld [vmem:[%s6] sm:$0xf]
        %1213 = vset.pattern.permute.xlu0 0
        %1214 = vperm.xlu0 %1213, %v1211
        %v1215 = vpop.permute.xlu0 %1214
        %1217 = vmatprep.subr.bf16.mxu0 0
        %1218 = vmatpush1.bf16.xpose.msra.mxu0 %v1202
        %1219 = vmatprep.subr.bf16.mxu0 0
        %1220 = vmatpush1.bf16.xpose.msra.mxu0 %v1203
        %1221 = vmatprep.subr.bf16.mxu0 0
        %1222 = vmatpush1.bf16.xpose.msra.mxu0 %v1204
        %1223 = vmatprep.subr.bf16.mxu0 0
        %1224 = vmatpush1.bf16.xpose.msra.mxu0 %v1205
        %1225 = vmatprep.subr.bf16.mxu0 0
        %1226 = vmatpush1.bf16.xpose.msra.mxu0 %v1206
        %1227 = vmatprep.subr.bf16.mxu0 0
        %1228 = vmatpush1.bf16.xpose.msra.mxu0 %v1207
        %1229 = vmatprep.subr.bf16.mxu0 0
        %1230 = vmatpush1.bf16.xpose.msra.mxu0 %v1208
        %1231 = vmatprep.subr.bf16.mxu0 0
        %1232 = vmatpush1.bf16.xpose.msra.mxu0 %v1209
        %1233 = vmatprep.subr.bf16.mxu0 0
        %1234 = vmatpush1.bf16.xpose.msra.mxu0 0
        %1235 = vmatprep.subr.bf16.mxu0 0
        %1236 = vmatpush1.bf16.xpose.msra.mxu0 0
        %1237 = vmatprep.subr.bf16.mxu0 0
        %1238 = vmatpush1.bf16.xpose.msra.mxu0 0
        %1239 = vmatprep.subr.bf16.mxu0 0
        %1240 = vmatpush1.bf16.xpose.msra.mxu0 0
        %1241 = vmatprep.subr.bf16.mxu0 0
        %1242 = vmatpush1.bf16.xpose.msra.mxu0 0
        %1243 = vmatprep.subr.bf16.mxu0 0
        %1244 = vmatpush1.bf16.xpose.msra.mxu0 0
        %1245 = vmatprep.subr.bf16.mxu0 0
        %1246 = vmatpush1.bf16.xpose.msra.mxu0 0
        %1247 = vmatprep.subr.bf16.mxu0 0
        %1248 = vmatpush1.bf16.xpose.msra.mxu0 0
        %1249 = vmatprep.mubr.bf16.mxu0 0
        %1250 = vmatmul.mubr.bf16.gmra.mrb[0].mxu0 %v1210
        %v1251 = vpop.f32.mrb[0].mxu0
        %v1252 = vadd.f32 %v1215, %v1251
        %v1253 = vpop.f32.mrb[0].mxu0
        %v1254 = vpop.f32.mrb[0].mxu0
        %v1255 = vpop.f32.mrb[0].mxu0
        %1256 = vdwg.mxu0
        %v1257 = vadd.f32 %v1252, %v361
        %1258 = vst [vmem:[%s319] sm:$0xf] %v1257
        %v1259 = vld [vmem:[%s3] sm:$0x1]
        %s1260 = scalar_lea.vmem [#allocation2], 192
        %v1261 = vld [vmem:[%s1260] sm:$0xff]
        %v1262 = vld [vmem:[%s1260 + $0x8] sm:$0xff]
        %v1263 = vld [vmem:[%s1260 + $0x18] sm:$0xff]
        %v1264 = vld [vmem:[%s1260 + $0x20] sm:$0xff]
        %v1265 = vld [vmem:[%s1260 + $0x30] sm:$0xff]
        %v1266 = vld [vmem:[%s1260 + $0x38] sm:$0xff]
        %v1267 = vld [vmem:[%s1260 + $0x48] sm:$0xff]
        %v1268 = vld [vmem:[%s1260 + $0x50] sm:$0xff]
        %v1269 = vld [vmem:[%s1260 + $0x60] sm:$0xff]
        %v1270 = vld [vmem:[%s1260 + $0x68] sm:$0xff]
        %v1271 = vld [vmem:[%s1260 + $0x78] sm:$0xff]
        %v1272 = vld [vmem:[%s1260 + $0x80] sm:$0xff]
        %v1273 = vld [vmem:[%s1260 + $0x90] sm:$0xff]
        %v1274 = vld [vmem:[%s1260 + $0x98] sm:$0xff]
        %v1275 = vld [vmem:[%s1260 + $0xa8] sm:$0xff]
        %v1276 = vld [vmem:[%s1260 + $0xb0] sm:$0xff]
        %v1277 = vlaneseq
        %v1278 = vshrl.u32 %v1277, 7
        %v1279 = vsub.s32 0, %v1278
        %v1280 = vrot.slane %v1259, %v1279
        %v1281 = vmul.f32 %v1261, %v1280
        %v1282 = vmul.f32 %v1262, %v1280
        %v1283 = vmul.f32 %v1263, %v1280
        %v1284 = vmul.f32 %v1264, %v1280
        %v1285 = vmul.f32 %v1265, %v1280
        %v1286 = vmul.f32 %v1266, %v1280
        %v1287 = vmul.f32 %v1267, %v1280
        %v1288 = vmul.f32 %v1268, %v1280
        %v1289 = vmul.f32 %v1269, %v1280
        %v1290 = vmul.f32 %v1270, %v1280
        %v1291 = vmul.f32 %v1271, %v1280
        %v1292 = vmul.f32 %v1272, %v1280
        %v1293 = vmul.f32 %v1273, %v1280
        %v1294 = vmul.f32 %v1274, %v1280
        %v1295 = vmul.f32 %v1275, %v1280
        %v1296 = vmul.f32 %v1276, %v1280
        %v1297 = vadd.f32 %v1281, 0.0
        %v1298 = vadd.f32 %v1282, 0.0
        %v1299 = vadd.f32 %v1283, 0.0
        %v1300 = vadd.f32 %v1284, 0.0
        %v1301 = vadd.f32 %v1285, 0.0
        %v1302 = vadd.f32 %v1286, 0.0
        %v1303 = vadd.f32 %v1287, 0.0
        %v1304 = vadd.f32 %v1288, 0.0
        %v1305 = vadd.f32 %v1289, 0.0
        %v1306 = vadd.f32 %v1290, 0.0
        %v1307 = vadd.f32 %v1291, 0.0
        %v1308 = vadd.f32 %v1292, 0.0
        %v1309 = vadd.f32 %v1293, 0.0
        %v1310 = vadd.f32 %v1294, 0.0
        %v1311 = vadd.f32 %v1295, 0.0
        %v1312 = vadd.f32 %v1296, 0.0
        %v1313 = vld [vmem:[%s3 + $0x1] sm:$0x1]
        %v1314 = vld [vmem:[%s1260 + $0x1] sm:$0xff]
        %v1315 = vld [vmem:[%s1260 + $0x9] sm:$0xff]
        %v1316 = vld [vmem:[%s1260 + $0x19] sm:$0xff]
        %v1317 = vld [vmem:[%s1260 + $0x21] sm:$0xff]
        %v1318 = vld [vmem:[%s1260 + $0x31] sm:$0xff]
        %v1319 = vld [vmem:[%s1260 + $0x39] sm:$0xff]
        %v1320 = vld [vmem:[%s1260 + $0x49] sm:$0xff]
        %v1321 = vld [vmem:[%s1260 + $0x51] sm:$0xff]
        %v1322 = vld [vmem:[%s1260 + $0x61] sm:$0xff]
        %v1323 = vld [vmem:[%s1260 + $0x69] sm:$0xff]
        %v1324 = vld [vmem:[%s1260 + $0x79] sm:$0xff]
        %v1325 = vld [vmem:[%s1260 + $0x81] sm:$0xff]
        %v1326 = vld [vmem:[%s1260 + $0x91] sm:$0xff]
        %v1327 = vld [vmem:[%s1260 + $0x99] sm:$0xff]
        %v1328 = vld [vmem:[%s1260 + $0xa9] sm:$0xff]
        %v1329 = vld [vmem:[%s1260 + $0xb1] sm:$0xff]
        %v1330 = vlaneseq
        %v1331 = vshrl.u32 %v1330, 7
        %v1332 = vsub.s32 0, %v1331
        %v1333 = vrot.slane %v1313, %v1332
        %v1334 = vmul.f32 %v1314, %v1333
        %v1335 = vmul.f32 %v1315, %v1333
        %v1336 = vmul.f32 %v1316, %v1333
        %v1337 = vmul.f32 %v1317, %v1333
        %v1338 = vmul.f32 %v1318, %v1333
        %v1339 = vmul.f32 %v1319, %v1333
        %v1340 = vmul.f32 %v1320, %v1333
        %v1341 = vmul.f32 %v1321, %v1333
        %v1342 = vmul.f32 %v1322, %v1333
        %v1343 = vmul.f32 %v1323, %v1333
        %v1344 = vmul.f32 %v1324, %v1333
        %v1345 = vmul.f32 %v1325, %v1333
        %v1346 = vmul.f32 %v1326, %v1333
        %v1347 = vmul.f32 %v1327, %v1333
        %v1348 = vmul.f32 %v1328, %v1333
        %v1349 = vmul.f32 %v1329, %v1333
        %v1350 = vadd.f32 %v1297, %v1334
        %v1351 = vadd.f32 %v1298, %v1335
        %v1352 = vadd.f32 %v1299, %v1336
        %v1353 = vadd.f32 %v1300, %v1337
        %v1354 = vadd.f32 %v1301, %v1338
        %v1355 = vadd.f32 %v1302, %v1339
        %v1356 = vadd.f32 %v1303, %v1340
        %v1357 = vadd.f32 %v1304, %v1341
        %v1358 = vadd.f32 %v1305, %v1342
        %v1359 = vadd.f32 %v1306, %v1343
        %v1360 = vadd.f32 %v1307, %v1344
        %v1361 = vadd.f32 %v1308, %v1345
        %v1362 = vadd.f32 %v1309, %v1346
        %v1363 = vadd.f32 %v1310, %v1347
        %v1364 = vadd.f32 %v1311, %v1348
        %v1365 = vadd.f32 %v1312, %v1349
        %v1366 = vld [vmem:[%s3 + $0x2] sm:$0x1]
        %v1367 = vld [vmem:[%s1260 + $0x2] sm:$0xff]
        %v1368 = vld [vmem:[%s1260 + $0xa] sm:$0xff]
        %v1369 = vld [vmem:[%s1260 + $0x1a] sm:$0xff]
        %v1370 = vld [vmem:[%s1260 + $0x22] sm:$0xff]
        %v1371 = vld [vmem:[%s1260 + $0x32] sm:$0xff]
        %v1372 = vld [vmem:[%s1260 + $0x3a] sm:$0xff]
        %v1373 = vld [vmem:[%s1260 + $0x4a] sm:$0xff]
        %v1374 = vld [vmem:[%s1260 + $0x52] sm:$0xff]
        %v1375 = vld [vmem:[%s1260 + $0x62] sm:$0xff]
        %v1376 = vld [vmem:[%s1260 + $0x6a] sm:$0xff]
        %v1377 = vld [vmem:[%s1260 + $0x7a] sm:$0xff]
        %v1378 = vld [vmem:[%s1260 + $0x82] sm:$0xff]
        %v1379 = vld [vmem:[%s1260 + $0x92] sm:$0xff]
        %v1380 = vld [vmem:[%s1260 + $0x9a] sm:$0xff]
        %v1381 = vld [vmem:[%s1260 + $0xaa] sm:$0xff]
        %v1382 = vld [vmem:[%s1260 + $0xb2] sm:$0xff]
        %v1383 = vlaneseq
        %v1384 = vshrl.u32 %v1383, 7
        %v1385 = vsub.s32 0, %v1384
        %v1386 = vrot.slane %v1366, %v1385
        %v1387 = vmul.f32 %v1367, %v1386
        %v1388 = vmul.f32 %v1368, %v1386
        %v1389 = vmul.f32 %v1369, %v1386
        %v1390 = vmul.f32 %v1370, %v1386
        %v1391 = vmul.f32 %v1371, %v1386
        %v1392 = vmul.f32 %v1372, %v1386
        %v1393 = vmul.f32 %v1373, %v1386
        %v1394 = vmul.f32 %v1374, %v1386
        %v1395 = vmul.f32 %v1375, %v1386
        %v1396 = vmul.f32 %v1376, %v1386
        %v1397 = vmul.f32 %v1377, %v1386
        %v1398 = vmul.f32 %v1378, %v1386
        %v1399 = vmul.f32 %v1379, %v1386
        %v1400 = vmul.f32 %v1380, %v1386
        %v1401 = vmul.f32 %v1381, %v1386
        %v1402 = vmul.f32 %v1382, %v1386
        %v1403 = vadd.f32 %v1350, %v1387
        %v1404 = vadd.f32 %v1351, %v1388
        %v1405 = vadd.f32 %v1352, %v1389
        %v1406 = vadd.f32 %v1353, %v1390
        %v1407 = vadd.f32 %v1354, %v1391
        %v1408 = vadd.f32 %v1355, %v1392
        %v1409 = vadd.f32 %v1356, %v1393
        %v1410 = vadd.f32 %v1357, %v1394
        %v1411 = vadd.f32 %v1358, %v1395
        %v1412 = vadd.f32 %v1359, %v1396
        %v1413 = vadd.f32 %v1360, %v1397
        %v1414 = vadd.f32 %v1361, %v1398
        %v1415 = vadd.f32 %v1362, %v1399
        %v1416 = vadd.f32 %v1363, %v1400
        %v1417 = vadd.f32 %v1364, %v1401
        %v1418 = vadd.f32 %v1365, %v1402
        %v1419 = vld [vmem:[%s3 + $0x3] sm:$0x1]
        %s1420 = scalar_lea.vmem [#allocation2], 216
        %v1421 = vld [vmem:[%s1420] sm:$0xff]
        %v1422 = vld [vmem:[%s1420 + $0x8] sm:$0xff]
        %v1423 = vld [vmem:[%s1420 + $0x18] sm:$0xff]
        %v1424 = vld [vmem:[%s1420 + $0x20] sm:$0xff]
        %v1425 = vld [vmem:[%s1420 + $0x30] sm:$0xff]
        %v1426 = vld [vmem:[%s1420 + $0x38] sm:$0xff]
        %v1427 = vld [vmem:[%s1420 + $0x48] sm:$0xff]
        %v1428 = vld [vmem:[%s1420 + $0x50] sm:$0xff]
        %v1429 = vld [vmem:[%s1420 + $0x60] sm:$0xff]
        %v1430 = vld [vmem:[%s1420 + $0x68] sm:$0xff]
        %v1431 = vld [vmem:[%s1420 + $0x78] sm:$0xff]
        %v1432 = vld [vmem:[%s1420 + $0x80] sm:$0xff]
        %v1433 = vld [vmem:[%s1420 + $0x90] sm:$0xff]
        %v1434 = vld [vmem:[%s1420 + $0x98] sm:$0xff]
        %v1435 = vld [vmem:[%s1420 + $0xa8] sm:$0xff]
        %v1436 = vld [vmem:[%s1420 + $0xb0] sm:$0xff]
        %v1437 = vlaneseq
        %v1438 = vshrl.u32 %v1437, 7
        %v1439 = vsub.s32 0, %v1438
        %v1440 = vrot.slane %v1419, %v1439
        %v1441 = vmul.f32 %v1421, %v1440
        %v1442 = vmul.f32 %v1422, %v1440
        %v1443 = vmul.f32 %v1423, %v1440
        %v1444 = vmul.f32 %v1424, %v1440
        %v1445 = vmul.f32 %v1425, %v1440
        %v1446 = vmul.f32 %v1426, %v1440
        %v1447 = vmul.f32 %v1427, %v1440
        %v1448 = vmul.f32 %v1428, %v1440
        %v1449 = vmul.f32 %v1429, %v1440
        %v1450 = vmul.f32 %v1430, %v1440
        %v1451 = vmul.f32 %v1431, %v1440
        %v1452 = vmul.f32 %v1432, %v1440
        %v1453 = vmul.f32 %v1433, %v1440
        %v1454 = vmul.f32 %v1434, %v1440
        %v1455 = vmul.f32 %v1435, %v1440
        %v1456 = vmul.f32 %v1436, %v1440
        %v1457 = vadd.f32 %v1403, %v1441
        %v1458 = vadd.f32 %v1404, %v1442
        %v1459 = vadd.f32 %v1405, %v1443
        %v1460 = vadd.f32 %v1406, %v1444
        %v1461 = vadd.f32 %v1407, %v1445
        %v1462 = vadd.f32 %v1408, %v1446
        %v1463 = vadd.f32 %v1409, %v1447
        %v1464 = vadd.f32 %v1410, %v1448
        %v1465 = vadd.f32 %v1411, %v1449
        %v1466 = vadd.f32 %v1412, %v1450
        %v1467 = vadd.f32 %v1413, %v1451
        %v1468 = vadd.f32 %v1414, %v1452
        %v1469 = vadd.f32 %v1415, %v1453
        %v1470 = vadd.f32 %v1416, %v1454
        %v1471 = vadd.f32 %v1417, %v1455
        %v1472 = vadd.f32 %v1418, %v1456
        %v1473 = vld [vmem:[%s3 + $0x4] sm:$0x1]
        %v1474 = vld [vmem:[%s1420 + $0x1] sm:$0xff]
        %v1475 = vld [vmem:[%s1420 + $0x9] sm:$0xff]
        %v1476 = vld [vmem:[%s1420 + $0x19] sm:$0xff]
        %v1477 = vld [vmem:[%s1420 + $0x21] sm:$0xff]
        %v1478 = vld [vmem:[%s1420 + $0x31] sm:$0xff]
        %v1479 = vld [vmem:[%s1420 + $0x39] sm:$0xff]
        %v1480 = vld [vmem:[%s1420 + $0x49] sm:$0xff]
        %v1481 = vld [vmem:[%s1420 + $0x51] sm:$0xff]
        %v1482 = vld [vmem:[%s1420 + $0x61] sm:$0xff]
        %v1483 = vld [vmem:[%s1420 + $0x69] sm:$0xff]
        %v1484 = vld [vmem:[%s1420 + $0x79] sm:$0xff]
        %v1485 = vld [vmem:[%s1420 + $0x81] sm:$0xff]
        %v1486 = vld [vmem:[%s1420 + $0x91] sm:$0xff]
        %v1487 = vld [vmem:[%s1420 + $0x99] sm:$0xff]
        %v1488 = vld [vmem:[%s1420 + $0xa9] sm:$0xff]
        %v1489 = vld [vmem:[%s1420 + $0xb1] sm:$0xff]
        %v1490 = vlaneseq
        %v1491 = vshrl.u32 %v1490, 7
        %v1492 = vsub.s32 0, %v1491
        %v1493 = vrot.slane %v1473, %v1492
        %v1494 = vmul.f32 %v1474, %v1493
        %v1495 = vmul.f32 %v1475, %v1493
        %v1496 = vmul.f32 %v1476, %v1493
        %v1497 = vmul.f32 %v1477, %v1493
        %v1498 = vmul.f32 %v1478, %v1493
        %v1499 = vmul.f32 %v1479, %v1493
        %v1500 = vmul.f32 %v1480, %v1493
        %v1501 = vmul.f32 %v1481, %v1493
        %v1502 = vmul.f32 %v1482, %v1493
        %v1503 = vmul.f32 %v1483, %v1493
        %v1504 = vmul.f32 %v1484, %v1493
        %v1505 = vmul.f32 %v1485, %v1493
        %v1506 = vmul.f32 %v1486, %v1493
        %v1507 = vmul.f32 %v1487, %v1493
        %v1508 = vmul.f32 %v1488, %v1493
        %v1509 = vmul.f32 %v1489, %v1493
        %v1510 = vadd.f32 %v1457, %v1494
        %v1511 = vadd.f32 %v1458, %v1495
        %v1512 = vadd.f32 %v1459, %v1496
        %v1513 = vadd.f32 %v1460, %v1497
        %v1514 = vadd.f32 %v1461, %v1498
        %v1515 = vadd.f32 %v1462, %v1499
        %v1516 = vadd.f32 %v1463, %v1500
        %v1517 = vadd.f32 %v1464, %v1501
        %v1518 = vadd.f32 %v1465, %v1502
        %v1519 = vadd.f32 %v1466, %v1503
        %v1520 = vadd.f32 %v1467, %v1504
        %v1521 = vadd.f32 %v1468, %v1505
        %v1522 = vadd.f32 %v1469, %v1506
        %v1523 = vadd.f32 %v1470, %v1507
        %v1524 = vadd.f32 %v1471, %v1508
        %v1525 = vadd.f32 %v1472, %v1509
        %v1526 = vld [vmem:[%s3 + $0x5] sm:$0x1]
        %v1527 = vld [vmem:[%s1420 + $0x2] sm:$0xff]
        %v1528 = vld [vmem:[%s1420 + $0xa] sm:$0xff]
        %v1529 = vld [vmem:[%s1420 + $0x1a] sm:$0xff]
        %v1530 = vld [vmem:[%s1420 + $0x22] sm:$0xff]
        %v1531 = vld [vmem:[%s1420 + $0x32] sm:$0xff]
        %v1532 = vld [vmem:[%s1420 + $0x3a] sm:$0xff]
        %v1533 = vld [vmem:[%s1420 + $0x4a] sm:$0xff]
        %v1534 = vld [vmem:[%s1420 + $0x52] sm:$0xff]
        %v1535 = vld [vmem:[%s1420 + $0x62] sm:$0xff]
        %v1536 = vld [vmem:[%s1420 + $0x6a] sm:$0xff]
        %v1537 = vld [vmem:[%s1420 + $0x7a] sm:$0xff]
        %v1538 = vld [vmem:[%s1420 + $0x82] sm:$0xff]
        %v1539 = vld [vmem:[%s1420 + $0x92] sm:$0xff]
        %v1540 = vld [vmem:[%s1420 + $0x9a] sm:$0xff]
        %v1541 = vld [vmem:[%s1420 + $0xaa] sm:$0xff]
        %v1542 = vld [vmem:[%s1420 + $0xb2] sm:$0xff]
        %v1543 = vlaneseq
        %v1544 = vshrl.u32 %v1543, 7
        %v1545 = vsub.s32 0, %v1544
        %v1546 = vrot.slane %v1526, %v1545
        %v1547 = vmul.f32 %v1527, %v1546
        %v1548 = vmul.f32 %v1528, %v1546
        %v1549 = vmul.f32 %v1529, %v1546
        %v1550 = vmul.f32 %v1530, %v1546
        %v1551 = vmul.f32 %v1531, %v1546
        %v1552 = vmul.f32 %v1532, %v1546
        %v1553 = vmul.f32 %v1533, %v1546
        %v1554 = vmul.f32 %v1534, %v1546
        %v1555 = vmul.f32 %v1535, %v1546
        %v1556 = vmul.f32 %v1536, %v1546
        %v1557 = vmul.f32 %v1537, %v1546
        %v1558 = vmul.f32 %v1538, %v1546
        %v1559 = vmul.f32 %v1539, %v1546
        %v1560 = vmul.f32 %v1540, %v1546
        %v1561 = vmul.f32 %v1541, %v1546
        %v1562 = vmul.f32 %v1542, %v1546
        %v1563 = vadd.f32 %v1510, %v1547
        %v1564 = vadd.f32 %v1511, %v1548
        %v1565 = vadd.f32 %v1512, %v1549
        %v1566 = vadd.f32 %v1513, %v1550
        %v1567 = vadd.f32 %v1514, %v1551
        %v1568 = vadd.f32 %v1515, %v1552
        %v1569 = vadd.f32 %v1516, %v1553
        %v1570 = vadd.f32 %v1517, %v1554
        %v1571 = vadd.f32 %v1518, %v1555
        %v1572 = vadd.f32 %v1519, %v1556
        %v1573 = vadd.f32 %v1520, %v1557
        %v1574 = vadd.f32 %v1521, %v1558
        %v1575 = vadd.f32 %v1522, %v1559
        %v1576 = vadd.f32 %v1523, %v1560
        %v1577 = vadd.f32 %v1524, %v1561
        %v1578 = vadd.f32 %v1525, %v1562
        %v1579 = vld [vmem:[%s3 + $0x6] sm:$0x1]
        %s1580 = scalar_lea.vmem [#allocation2], 240
        %v1581 = vld [vmem:[%s1580] sm:$0xff]
        %v1582 = vld [vmem:[%s1580 + $0x8] sm:$0xff]
        %v1583 = vld [vmem:[%s1580 + $0x18] sm:$0xff]
        %v1584 = vld [vmem:[%s1580 + $0x20] sm:$0xff]
        %v1585 = vld [vmem:[%s1580 + $0x30] sm:$0xff]
        %v1586 = vld [vmem:[%s1580 + $0x38] sm:$0xff]
        %v1587 = vld [vmem:[%s1580 + $0x48] sm:$0xff]
        %v1588 = vld [vmem:[%s1580 + $0x50] sm:$0xff]
        %v1589 = vld [vmem:[%s1580 + $0x60] sm:$0xff]
        %v1590 = vld [vmem:[%s1580 + $0x68] sm:$0xff]
        %v1591 = vld [vmem:[%s1580 + $0x78] sm:$0xff]
        %v1592 = vld [vmem:[%s1580 + $0x80] sm:$0xff]
        %v1593 = vld [vmem:[%s1580 + $0x90] sm:$0xff]
        %v1594 = vld [vmem:[%s1580 + $0x98] sm:$0xff]
        %v1595 = vld [vmem:[%s1580 + $0xa8] sm:$0xff]
        %v1596 = vld [vmem:[%s1580 + $0xb0] sm:$0xff]
        %v1597 = vlaneseq
        %v1598 = vshrl.u32 %v1597, 7
        %v1599 = vsub.s32 0, %v1598
        %v1600 = vrot.slane %v1579, %v1599
        %v1601 = vmul.f32 %v1581, %v1600
        %v1602 = vmul.f32 %v1582, %v1600
        %v1603 = vmul.f32 %v1583, %v1600
        %v1604 = vmul.f32 %v1584, %v1600
        %v1605 = vmul.f32 %v1585, %v1600
        %v1606 = vmul.f32 %v1586, %v1600
        %v1607 = vmul.f32 %v1587, %v1600
        %v1608 = vmul.f32 %v1588, %v1600
        %v1609 = vmul.f32 %v1589, %v1600
        %v1610 = vmul.f32 %v1590, %v1600
        %v1611 = vmul.f32 %v1591, %v1600
        %v1612 = vmul.f32 %v1592, %v1600
        %v1613 = vmul.f32 %v1593, %v1600
        %v1614 = vmul.f32 %v1594, %v1600
        %v1615 = vmul.f32 %v1595, %v1600
        %v1616 = vmul.f32 %v1596, %v1600
        %v1617 = vadd.f32 %v1563, %v1601
        %v1618 = vadd.f32 %v1564, %v1602
        %v1619 = vadd.f32 %v1565, %v1603
        %v1620 = vadd.f32 %v1566, %v1604
        %v1621 = vadd.f32 %v1567, %v1605
        %v1622 = vadd.f32 %v1568, %v1606
        %v1623 = vadd.f32 %v1569, %v1607
        %v1624 = vadd.f32 %v1570, %v1608
        %v1625 = vadd.f32 %v1571, %v1609
        %v1626 = vadd.f32 %v1572, %v1610
        %v1627 = vadd.f32 %v1573, %v1611
        %v1628 = vadd.f32 %v1574, %v1612
        %v1629 = vadd.f32 %v1575, %v1613
        %v1630 = vadd.f32 %v1576, %v1614
        %v1631 = vadd.f32 %v1577, %v1615
        %v1632 = vadd.f32 %v1578, %v1616
        %v1633 = vld [vmem:[%s3 + $0x7] sm:$0x1]
        %v1634 = vld [vmem:[%s1580 + $0x1] sm:$0xff]
        %v1635 = vld [vmem:[%s1580 + $0x9] sm:$0xff]
        %v1636 = vld [vmem:[%s1580 + $0x19] sm:$0xff]
        %v1637 = vld [vmem:[%s1580 + $0x21] sm:$0xff]
        %v1638 = vld [vmem:[%s1580 + $0x31] sm:$0xff]
        %v1639 = vld [vmem:[%s1580 + $0x39] sm:$0xff]
        %v1640 = vld [vmem:[%s1580 + $0x49] sm:$0xff]
        %v1641 = vld [vmem:[%s1580 + $0x51] sm:$0xff]
        %v1642 = vld [vmem:[%s1580 + $0x61] sm:$0xff]
        %v1643 = vld [vmem:[%s1580 + $0x69] sm:$0xff]
        %v1644 = vld [vmem:[%s1580 + $0x79] sm:$0xff]
        %v1645 = vld [vmem:[%s1580 + $0x81] sm:$0xff]
        %v1646 = vld [vmem:[%s1580 + $0x91] sm:$0xff]
        %v1647 = vld [vmem:[%s1580 + $0x99] sm:$0xff]
        %v1648 = vld [vmem:[%s1580 + $0xa9] sm:$0xff]
        %v1649 = vld [vmem:[%s1580 + $0xb1] sm:$0xff]
        %v1650 = vlaneseq
        %v1651 = vshrl.u32 %v1650, 7
        %v1652 = vsub.s32 0, %v1651
        %v1653 = vrot.slane %v1633, %v1652
        %v1654 = vmul.f32 %v1634, %v1653
        %v1655 = vmul.f32 %v1635, %v1653
        %v1656 = vmul.f32 %v1636, %v1653
        %v1657 = vmul.f32 %v1637, %v1653
        %v1658 = vmul.f32 %v1638, %v1653
        %v1659 = vmul.f32 %v1639, %v1653
        %v1660 = vmul.f32 %v1640, %v1653
        %v1661 = vmul.f32 %v1641, %v1653
        %v1662 = vmul.f32 %v1642, %v1653
        %v1663 = vmul.f32 %v1643, %v1653
        %v1664 = vmul.f32 %v1644, %v1653
        %v1665 = vmul.f32 %v1645, %v1653
        %v1666 = vmul.f32 %v1646, %v1653
        %v1667 = vmul.f32 %v1647, %v1653
        %v1668 = vmul.f32 %v1648, %v1653
        %v1669 = vmul.f32 %v1649, %v1653
        %v1670 = vadd.f32 %v1617, %v1654
        %v1671 = vadd.f32 %v1618, %v1655
        %v1672 = vadd.f32 %v1619, %v1656
        %v1673 = vadd.f32 %v1620, %v1657
        %v1674 = vadd.f32 %v1621, %v1658
        %v1675 = vadd.f32 %v1622, %v1659
        %v1676 = vadd.f32 %v1623, %v1660
        %v1677 = vadd.f32 %v1624, %v1661
        %v1678 = vadd.f32 %v1625, %v1662
        %v1679 = vadd.f32 %v1626, %v1663
        %v1680 = vadd.f32 %v1627, %v1664
        %v1681 = vadd.f32 %v1628, %v1665
        %v1682 = vadd.f32 %v1629, %v1666
        %v1683 = vadd.f32 %v1630, %v1667
        %v1684 = vadd.f32 %v1631, %v1668
        %v1685 = vadd.f32 %v1632, %v1669
        %v1686 = vld [vmem:[%s3 + $0x8] sm:$0x1]
        %v1687 = vld [vmem:[%s1580 + $0x2] sm:$0xff]
        %v1688 = vld [vmem:[%s1580 + $0xa] sm:$0xff]
        %v1689 = vld [vmem:[%s1580 + $0x1a] sm:$0xff]
        %v1690 = vld [vmem:[%s1580 + $0x22] sm:$0xff]
        %v1691 = vld [vmem:[%s1580 + $0x32] sm:$0xff]
        %v1692 = vld [vmem:[%s1580 + $0x3a] sm:$0xff]
        %v1693 = vld [vmem:[%s1580 + $0x4a] sm:$0xff]
        %v1694 = vld [vmem:[%s1580 + $0x52] sm:$0xff]
        %v1695 = vld [vmem:[%s1580 + $0x62] sm:$0xff]
        %v1696 = vld [vmem:[%s1580 + $0x6a] sm:$0xff]
        %v1697 = vld [vmem:[%s1580 + $0x7a] sm:$0xff]
        %v1698 = vld [vmem:[%s1580 + $0x82] sm:$0xff]
        %v1699 = vld [vmem:[%s1580 + $0x92] sm:$0xff]
        %v1700 = vld [vmem:[%s1580 + $0x9a] sm:$0xff]
        %v1701 = vld [vmem:[%s1580 + $0xaa] sm:$0xff]
        %v1702 = vld [vmem:[%s1580 + $0xb2] sm:$0xff]
        %v1703 = vlaneseq
        %v1704 = vshrl.u32 %v1703, 7
        %v1705 = vsub.s32 0, %v1704
        %v1706 = vrot.slane %v1686, %v1705
        %v1707 = vmul.f32 %v1687, %v1706
        %v1708 = vmul.f32 %v1688, %v1706
        %v1709 = vmul.f32 %v1689, %v1706
        %v1710 = vmul.f32 %v1690, %v1706
        %v1711 = vmul.f32 %v1691, %v1706
        %v1712 = vmul.f32 %v1692, %v1706
        %v1713 = vmul.f32 %v1693, %v1706
        %v1714 = vmul.f32 %v1694, %v1706
        %v1715 = vmul.f32 %v1695, %v1706
        %v1716 = vmul.f32 %v1696, %v1706
        %v1717 = vmul.f32 %v1697, %v1706
        %v1718 = vmul.f32 %v1698, %v1706
        %v1719 = vmul.f32 %v1699, %v1706
        %v1720 = vmul.f32 %v1700, %v1706
        %v1721 = vmul.f32 %v1701, %v1706
        %v1722 = vmul.f32 %v1702, %v1706
        %v1723 = vadd.f32 %v1670, %v1707
        %v1724 = vadd.f32 %v1671, %v1708
        %v1725 = vadd.f32 %v1672, %v1709
        %v1726 = vadd.f32 %v1673, %v1710
        %v1727 = vadd.f32 %v1674, %v1711
        %v1728 = vadd.f32 %v1675, %v1712
        %v1729 = vadd.f32 %v1676, %v1713
        %v1730 = vadd.f32 %v1677, %v1714
        %v1731 = vadd.f32 %v1678, %v1715
        %v1732 = vadd.f32 %v1679, %v1716
        %v1733 = vadd.f32 %v1680, %v1717
        %v1734 = vadd.f32 %v1681, %v1718
        %v1735 = vadd.f32 %v1682, %v1719
        %v1736 = vadd.f32 %v1683, %v1720
        %v1737 = vadd.f32 %v1684, %v1721
        %v1738 = vadd.f32 %v1685, %v1722
        %v1739 = vld [vmem:[%s4] sm:$0x1]
        %v1741 = vlaneseq
        %v1742 = vshrl.u32 %v1741, 7
        %v1743 = vsub.s32 0, %v1742
        %v1744 = vrot.slane %v1739, %v1743
        %v1746 = vadd.f32 %v1723, %v1744
        %v1747 = vadd.f32 %v1724, %v1744
        %v1748 = vadd.f32 %v1725, %v1744
        %v1749 = vadd.f32 %v1726, %v1744
        %v1750 = vadd.f32 %v1727, %v1744
        %v1751 = vadd.f32 %v1728, %v1744
        %v1752 = vadd.f32 %v1729, %v1744
        %v1753 = vadd.f32 %v1730, %v1744
        %v1754 = vadd.f32 %v1731, %v1744
        %v1755 = vadd.f32 %v1732, %v1744
        %v1756 = vadd.f32 %v1733, %v1744
        %v1757 = vadd.f32 %v1734, %v1744
        %v1758 = vadd.f32 %v1735, %v1744
        %v1759 = vadd.f32 %v1736, %v1744
        %v1760 = vadd.f32 %v1737, %v1744
        %v1761 = vadd.f32 %v1738, %v1744
        %v1762 = vmax.f32 %v1746, 0.0
        %v1763 = vmax.f32 %v1747, 0.0
        %v1764 = vmax.f32 %v1748, 0.0
        %v1765 = vmax.f32 %v1749, 0.0
        %v1766 = vmax.f32 %v1750, 0.0
        %v1767 = vmax.f32 %v1751, 0.0
        %v1768 = vmax.f32 %v1752, 0.0
        %v1769 = vmax.f32 %v1753, 0.0
        %v1770 = vmax.f32 %v1754, 0.0
        %v1771 = vmax.f32 %v1755, 0.0
        %v1772 = vmax.f32 %v1756, 0.0
        %v1773 = vmax.f32 %v1757, 0.0
        %v1774 = vmax.f32 %v1758, 0.0
        %v1775 = vmax.f32 %v1759, 0.0
        %v1776 = vmax.f32 %v1760, 0.0
        %v1777 = vmax.f32 %v1761, 0.0
        %v1778 = vpack.c.bf16 %v1763, %v1762
        %v1779 = vpack.c.bf16 %v1765, %v1764
        %v1780 = vpack.c.bf16 %v1767, %v1766
        %v1781 = vpack.c.bf16 %v1769, %v1768
        %v1782 = vpack.c.bf16 %v1771, %v1770
        %v1783 = vpack.c.bf16 %v1773, %v1772
        %v1784 = vpack.c.bf16 %v1775, %v1774
        %v1785 = vpack.c.bf16 %v1777, %v1776
        %v1786 = vld [vmem:[%s5] sm:$0x3]
        %v1787 = vld [vmem:[%s6] sm:$0xf]
        %1789 = vset.pattern.permute.xlu0 0
        %1790 = vperm.xlu0 %1789, %v1787
        %v1791 = vpop.permute.xlu0 %1790
        %1793 = vmatprep.subr.bf16.mxu0 0
        %1794 = vmatpush1.bf16.xpose.msra.mxu0 %v1778
        %1795 = vmatprep.subr.bf16.mxu0 0
        %1796 = vmatpush1.bf16.xpose.msra.mxu0 %v1779
        %1797 = vmatprep.subr.bf16.mxu0 0
        %1798 = vmatpush1.bf16.xpose.msra.mxu0 %v1780
        %1799 = vmatprep.subr.bf16.mxu0 0
        %1800 = vmatpush1.bf16.xpose.msra.mxu0 %v1781
        %1801 = vmatprep.subr.bf16.mxu0 0
        %1802 = vmatpush1.bf16.xpose.msra.mxu0 %v1782
        %1803 = vmatprep.subr.bf16.mxu0 0
        %1804 = vmatpush1.bf16.xpose.msra.mxu0 %v1783
        %1805 = vmatprep.subr.bf16.mxu0 0
        %1806 = vmatpush1.bf16.xpose.msra.mxu0 %v1784
        %1807 = vmatprep.subr.bf16.mxu0 0
        %1808 = vmatpush1.bf16.xpose.msra.mxu0 %v1785
        %1809 = vmatprep.subr.bf16.mxu0 0
        %1810 = vmatpush1.bf16.xpose.msra.mxu0 0
        %1811 = vmatprep.subr.bf16.mxu0 0
        %1812 = vmatpush1.bf16.xpose.msra.mxu0 0
        %1813 = vmatprep.subr.bf16.mxu0 0
        %1814 = vmatpush1.bf16.xpose.msra.mxu0 0
        %1815 = vmatprep.subr.bf16.mxu0 0
        %1816 = vmatpush1.bf16.xpose.msra.mxu0 0
        %1817 = vmatprep.subr.bf16.mxu0 0
        %1818 = vmatpush1.bf16.xpose.msra.mxu0 0
        %1819 = vmatprep.subr.bf16.mxu0 0
        %1820 = vmatpush1.bf16.xpose.msra.mxu0 0
        %1821 = vmatprep.subr.bf16.mxu0 0
        %1822 = vmatpush1.bf16.xpose.msra.mxu0 0
        %1823 = vmatprep.subr.bf16.mxu0 0
        %1824 = vmatpush1.bf16.xpose.msra.mxu0 0
        %1825 = vmatprep.mubr.bf16.mxu0 0
        %1826 = vmatmul.mubr.bf16.gmra.mrb[0].mxu0 %v1786
        %v1827 = vpop.f32.mrb[0].mxu0
        %v1828 = vadd.f32 %v1791, %v1827
        %v1829 = vpop.f32.mrb[0].mxu0
        %v1830 = vpop.f32.mrb[0].mxu0
        %v1831 = vpop.f32.mrb[0].mxu0
        %1832 = vdwg.mxu0
        %v1833 = vadd.f32 %v1828, %v363
        %1834 = vst [vmem:[%s319 + $0x4] sm:$0xf] %v1833
        %s1835 = sand.u32 %s185, 1
        %s1836 = scalar_lea.sflag [#allocation5], %s1835
        %s1837 = sand.u32 %s185, 1
        %s1838 = smul.addr %s1837, 8
        %s1839 = scalar_lea.vmem [#allocation9], %s1838
        // Predicated region
        $region61: #{tpu_custom_call.1} parent=47 // pred_check
          %p1840 = pneg %p195
        $region62: #{tpu_custom_call.1} parent=47 // pred_check_branch
          %1842 = sbr.rel (%p1840) target = $region64
        $region63: #{tpu_custom_call.1} parent=47 // pred_region
          %s1844 = ssub.s32 128, 128
          %1845 = vsyncadd %s1836, %s1844
          %s1846 = smul.addr %s25, 2
          %s1847 = smul.addr %s1846, 64
          %s1848 = scalar_lea.hbm %s7, %s1847
          %s1850 = sshll.u32 %s1839, 4
          %s1851 = int_to_ptr.vmem [resolvable:$true] %s1850
          %1853 = dma.vmem_to_hbm [thread:$0]  %s1851, 128, %s1848, %s1836
        $region64: #{tpu_custom_call.1} parent=47 // pred_fallthru
          _
      $region48: #{tpu_custom_call.1} parent=5 // pred_fallthru
        _
      %p1854 = scmp.le.s32.totalorder 2, %s20
      // Predicated region
      $region65: #{tpu_custom_call.1} parent=5 // pred_check
        %p1855 = pneg %p1854
      $region66: #{tpu_custom_call.1} parent=5 // pred_check_branch
        %1857 = sbr.rel (%p1855) target = $region68
      $region67: #{tpu_custom_call.1} parent=5 // pred_region
        %s1858 = ssub.s32 %s20, 2
        // Predicated region
        $region69: #{tpu_custom_call.1} parent=67 // pred_check
          %p1859 = pneg %p201
        $region70: #{tpu_custom_call.1} parent=67 // pred_check_branch
          %1861 = sbr.rel (%p1859) target = $region72
        $region71: #{tpu_custom_call.1} parent=67 // pred_region
          %s1862 = sand.u32 %s186, 1
          %s1863 = scalar_lea.sflag [#allocation5], %s1862
          %s1864 = sand.u32 %s186, 1
          %s1865 = smul.addr %s1864, 8
          %s1866 = scalar_lea.vmem [#allocation9], %s1865
          %1867 = dma.done %s1863, 128
        $region72: #{tpu_custom_call.1} parent=67 // pred_fallthru
          _
      $region68: #{tpu_custom_call.1} parent=5 // pred_fallthru
        _
    $region6: #{tpu_custom_call.1} parent=1 // loop_footer
      %s24 = sadd.s32 1, %s20
    $region7: #{tpu_custom_call.1} parent=1 // loop_footer_branch
      %19 = sbr.rel target = $region3
    $region8: #{tpu_custom_call.1} parent=1 // loop_exit
      _
    %1868 = vsyncpa [#allocation4], 1
    %s1869 = scalar_lea.sflag [#allocation4], 1
    %1870 = vsyncpa %s1869, 1
    %1871 = vsyncpa [#allocation7], 1
    %1872 = vsyncpa [#allocation5], 1
    %s1873 = scalar_lea.sflag [#allocation5], 1
    %1874 = vsyncpa %s1873, 1

</llo_original>
